<compile_context>
chip_gen: v7x
topology: tpu7x:2x2x1
jax: 0.10.0
libtpu: 0.0.40
codegen_flags: <defaults>
</compile_context>

<pallas_src>
import functools

import jax
import jax.numpy as jnp
from jax import lax
from jax.experimental import pallas as pl
from jax.experimental.pallas import tpu as pltpu


def _round_up(x, m):
    return ((x + m - 1) // m) * m


# ----------------------------------------------------------------------------
# Kernel 1: fused complex linear projections.
#   xr/xi/yr/yi : (tm, D) row tiles
#   w_ref       : (4D, Dout_pad) block weight (resident across the grid)
#   b_ref       : (1, Dout_pad)
#   o_ref       : (tm, Dout_pad) = [qr | qi | kr | ki | vr | vi | 0-pad]
# ----------------------------------------------------------------------------
def _proj_kernel(xr_ref, xi_ref, yr_ref, yi_ref, w_ref, b_ref, o_ref, *, D):
    acc = jnp.dot(xr_ref[...], w_ref[0 * D:1 * D, :],
                  preferred_element_type=jnp.float32)
    acc = acc + jnp.dot(xi_ref[...], w_ref[1 * D:2 * D, :],
                        preferred_element_type=jnp.float32)
    acc = acc + jnp.dot(yr_ref[...], w_ref[2 * D:3 * D, :],
                        preferred_element_type=jnp.float32)
    acc = acc + jnp.dot(yi_ref[...], w_ref[3 * D:4 * D, :],
                        preferred_element_type=jnp.float32)
    o_ref[...] = acc + b_ref[...]


def _proj_call(xr, xi, yr, yi, w_blk, b_blk, *, D, tm):
    M = xr.shape[0]
    Dout = w_blk.shape[1]
    row_spec = pl.BlockSpec((tm, D), lambda i: (i, 0))
    # NOTE: W_blk's block index never changes; on very large D it should be
    # single-buffered (pipeline_mode=pl.Buffered(1)) / column-tiled for v7x's
    # smaller VMEM.  At these sizes (4D x 128 f32) it is negligible.
    return pl.pallas_call(
        functools.partial(_proj_kernel, D=D),
        grid=(pl.cdiv(M, tm),),
        in_specs=[row_spec, row_spec, row_spec, row_spec,
                  pl.BlockSpec((4 * D, Dout), lambda i: (0, 0)),
                  pl.BlockSpec((1, Dout), lambda i: (0, 0))],
        out_specs=pl.BlockSpec((tm, Dout), lambda i: (i, 0)),
        out_shape=jax.ShapeDtypeStruct((M, Dout), jnp.float32),
        compiler_params=pltpu.CompilerParams(
            dimension_semantics=("parallel",),
            vmem_limit_bytes=32 * 1024 * 1024),
    )(xr, xi, yr, yi, w_blk, b_blk)


def _fuse_proj_params(params, D):
    """Build the (4D, pad(6D)) block weight + (1, pad(6D)) bias.

    Rows correspond to [xr, xi, yr, yi]; columns to [qr, qi, kr, ki, vr, vi].
    Weights are pre-transposed here (XLA side) so the kernel needs no .T.
    Columns are zero-padded up to a multiple of 128 for lane-dense stores.
    """
    wqr, wqi = params["wqr"].T, params["wqi"].T
    wkr, wki = params["wkr"].T, params["wki"].T
    wvr, wvi = params["wvr"].T, params["wvi"].T
    z = jnp.zeros((D, D), jnp.float32)
    row_xr = jnp.concatenate([wqr,  wqi,  z,    z,    z,    z], axis=1)
    row_xi = jnp.concatenate([-wqi, wqr,  z,    z,    z,    z], axis=1)
    row_yr = jnp.concatenate([z,    z,    wkr,  wki,  wvr,  wvi], axis=1)
    row_yi = jnp.concatenate([z,    z,   -wki,  wkr, -wvi,  wvr], axis=1)
    w_blk = jnp.concatenate([row_xr, row_xi, row_yr, row_yi], axis=0)  # (4D,6D)

    bqr, bqi = params["bqr"], params["bqi"]
    bkr, bki = params["bkr"], params["bki"]
    bvr, bvi = params["bvr"], params["bvi"]
    b_blk = jnp.concatenate(
        [bqr - bqi, bqr + bqi, bkr - bki, bkr + bki, bvr - bvi, bvr + bvi],
        axis=1)                                                        # (1,6D)

    Dout_pad = _round_up(6 * D, 128)
    pad = Dout_pad - 6 * D
    if pad:
        w_blk = jnp.pad(w_blk, ((0, 0), (0, pad)))
        b_blk = jnp.pad(b_blk, ((0, 0), (0, pad)))
    return w_blk, b_blk


# ----------------------------------------------------------------------------
# Kernel 2: fused complex attention with lane-dense transposed output.
#   qq   : (1, tq, 2d) = [Qr | Qi]
#   kcat : (1, n,  2d) = [Kr | Ki]   (single K-side array)
#   vv   : (1, n,  2d) = [Vr | Vi]
#   out  : (1, 2d, tq) — last dim tq (multiple of 128) -> unmasked stores.
# ----------------------------------------------------------------------------
def _attn_kernel(qq_ref, kcat_ref, vv_ref, o_ref, *, d):
    qq = qq_ref[0]     # (tq, 2d)
    kv = kcat_ref[0]   # (n, 2d)
    vv = vv_ref[0]     # (n, 2d)

    qr = qq[:, :d]
    qi = qq[:, d:]
    qa = jnp.concatenate([qr, -qi], axis=-1)   # [Qr | -Qi]
    qb = jnp.concatenate([qi, qr], axis=-1)    # [Qi |  Qr]

    dn = (((1,), (1,)), ((), ()))              # contract the fused 2d dim
    sr = lax.dot_general(qa, kv, dn, preferred_element_type=jnp.float32)
    si = lax.dot_general(qb, kv, dn, preferred_element_type=jnp.float32)
    scores = jnp.sqrt(sr * sr + si * si)

    m = jnp.max(scores, axis=-1, keepdims=True)
    e = jnp.exp(scores - m)
    s = jnp.sum(e, axis=-1, keepdims=True)
    w = e / s                                   # exact softmax (torch parity)

    # Transposed output matmul: contract vv's n with w's n -> (2d, tq).
    dn_o = (((0,), (1,)), ((), ()))
    o_ref[0] = lax.dot_general(vv, w, dn_o, preferred_element_type=jnp.float32)


def _attn_call(qq, kcat, vv, *, d, tq):
    b, n, d2 = qq.shape
    return pl.pallas_call(
        functools.partial(_attn_kernel, d=d),
        grid=(b, pl.cdiv(n, tq)),
        in_specs=[
            pl.BlockSpec((1, tq, d2), lambda bi, qi: (bi, qi, 0)),
            pl.BlockSpec((1, n, d2), lambda bi, qi: (bi, 0, 0)),
            pl.BlockSpec((1, n, d2), lambda bi, qi: (bi, 0, 0)),
        ],
        out_specs=pl.BlockSpec((1, d2, tq), lambda bi, qi: (bi, 0, qi)),
        out_shape=jax.ShapeDtypeStruct((b, d2, n), jnp.float32),
        compiler_params=pltpu.CompilerParams(
            dimension_semantics=("parallel", "parallel"),
            vmem_limit_bytes=32 * 1024 * 1024),
    )(qq, kcat, vv)


# ----------------------------------------------------------------------------
# Full forward pass (glue: FFT / reshapes / concat in plain JAX).
# ----------------------------------------------------------------------------
@jax.jit
def fourier_cross_attention(x, y, params):
    b, c, h, w = x.shape
    D = w          # input_dim
    n = h * w
    d = c

    # TODO(synk): fft2/ifft2 have no Pallas primitive; they stay in XLA.
    x_freq = jnp.fft.fft2(x)
    y_freq = jnp.fft.fft2(y)

    xr = jnp.real(x_freq).reshape(-1, D).astype(jnp.float32)
    xi = jnp.imag(x_freq).reshape(-1, D).astype(jnp.float32)
    yr = jnp.real(y_freq).reshape(-1, D).astype(jnp.float32)
    yi = jnp.imag(y_freq).reshape(-1, D).astype(jnp.float32)

    w_blk, b_blk = _fuse_proj_params(params, D)

    M = xr.shape[0]                                   # b*c*h
    # Row tile: aim for ~8 pipelined grid steps (>=2 per TensorCore on v7x).
    tm = max(8, min(512, _round_up(pl.cdiv(M, 8), 8)))
    proj = _proj_call(xr, xi, yr, yi, w_blk, b_blk, D=D, tm=tm)  # (M, pad(6D))

    # TODO(synk): the (M,D)->(b,n,d) relayout is a pure row-major view scramble
    # (torch .view); it plus the real/imag concats stay as thin XLA glue rather
    # than an in-kernel cross-lane re-layout.
    def take(k):
        return proj[:, k * D:(k + 1) * D].reshape(b, n, d)

    qr, qi, kr, ki, vr, vi = (take(k) for k in range(6))
    qq = jnp.concatenate([qr, qi], axis=-1)           # (b, n, 2d)
    kcat = jnp.concatenate([kr, ki], axis=-1)         # single K-side array
    vv = jnp.concatenate([vr, vi], axis=-1)

    # Query tile: lane-dense output tile, <=256 (v7x VMEM-safe), deeper grid.
    tq = 128 if (n % 128 == 0 and n > 128) else n
    out_t = _attn_call(qq, kcat, vv, d=d, tq=tq)      # (b, 2d, n) lane-dense

    out_r = jnp.transpose(out_t[:, :d, :], (0, 2, 1))  # (b, n, d)
    out_i = jnp.transpose(out_t[:, d:, :], (0, 2, 1))
    attn_out = lax.complex(out_r, out_i)
    attn_out = jnp.fft.ifft2(attn_out)                 # over last two dims

    # torch.view_as_real -> (..., 2) with real/imag stacked last.
    return jnp.stack([jnp.real(attn_out), jnp.imag(attn_out)], axis=-1)


def init_params(key, input_dim):
    """Deterministic PyTorch-Linear-style init: U(-1/sqrt(D), 1/sqrt(D))."""
    bound = 1.0 / jnp.sqrt(jnp.float32(input_dim))
    names = ["qr", "qi", "kr", "ki", "vr", "vi"]
    params = {}
    keys = jax.random.split(key, 2 * len(names))
    for i, name in enumerate(names):
        kw, kb = keys[2 * i], keys[2 * i + 1]
        params["w" + name] = jax.random.uniform(
            kw, (input_dim, input_dim), jnp.float32, -bound, bound)
        params["b" + name] = jax.random.uniform(
            kb, (1, input_dim), jnp.float32, -bound, bound)
    return params


if __name__ == "__main__":
    key = jax.random.PRNGKey(0)
    k_x, k_y, k_p = jax.random.split(key, 3)

    b, c, h, w = 2, 4, 16, 16      # input_dim = w = 16
    x = jax.random.normal(k_x, (b, c, h, w), jnp.float32)
    y = jax.random.normal(k_y, (b, c, h, w), jnp.float32)
    params = init_params(k_p, w)

    out = fourier_cross_attention(x, y, params)
    out = jax.block_until_ready(out)
    assert out.shape == (b, h * w, c, 2), out.shape
    print("KERNEL_OK")
</pallas_src>

<mosaic_0001>
module attributes {stable_mosaic.version = 11 : i64} {
  func.func @_proj_kernel(%arg0: i32, %arg1: memref<16x16xf32, #tpu.memory_space<vmem>>, %arg2: memref<16x16xf32, #tpu.memory_space<vmem>>, %arg3: memref<16x16xf32, #tpu.memory_space<vmem>>, %arg4: memref<16x16xf32, #tpu.memory_space<vmem>>, %arg5: memref<64x128xf32, #tpu.memory_space<vmem>>, %arg6: memref<1x128xf32, #tpu.memory_space<vmem>>, %arg7: memref<16x128xf32, #tpu.memory_space<vmem>>) attributes {dimension_semantics = [#tpu.dimension_semantics<parallel>], iteration_bounds = array<i64: 8>, scalar_prefetch = 0 : i64, scratch_operands = 0 : i64, tpu.core_type = #tpu.core_type<tc>, window_params = [{transform_indices = @transform_0, window_bounds = array<i64: 16, 16>}, {transform_indices = @transform_1, window_bounds = array<i64: 16, 16>}, {transform_indices = @transform_2, window_bounds = array<i64: 16, 16>}, {transform_indices = @transform_3, window_bounds = array<i64: 16, 16>}, {pipeline_mode = #tpu.pipeline_mode<synchronous>, transform_indices = @transform_4, window_bounds = array<i64: 64, 128>}, {pipeline_mode = #tpu.pipeline_mode<synchronous>, transform_indices = @transform_5, window_bounds = array<i64: 1, 128>}, {transform_indices = @transform_6, window_bounds = array<i64: 16, 128>}]} {
    %c0 = arith.constant 0 : index
    %c0_0 = arith.constant 0 : index
    %0 = vector.load %arg1[%c0, %c0_0] : memref<16x16xf32, #tpu.memory_space<vmem>>, vector<16x16xf32>
    %c0_1 = arith.constant 0 : index
    %c0_2 = arith.constant 0 : index
    %1 = vector.load %arg5[%c0_1, %c0_2] : memref<64x128xf32, #tpu.memory_space<vmem>>, vector<16x128xf32>
    %cst = arith.constant dense<0.000000e+00> : vector<16x128xf32>
    %2 = tpu.matmul %0, %1, %cst {dimension_numbers = #tpu.dot_dimension_numbers<[1], [0], [0], [1], [0, 0, 1, 1], [], []>} : vector<16x16xf32>, vector<16x128xf32>, vector<16x128xf32> -> vector<16x128xf32>
    %c0_3 = arith.constant 0 : index
    %c0_4 = arith.constant 0 : index
    %3 = vector.load %arg2[%c0_3, %c0_4] : memref<16x16xf32, #tpu.memory_space<vmem>>, vector<16x16xf32>
    %c16 = arith.constant 16 : index
    %c0_5 = arith.constant 0 : index
    %4 = vector.load %arg5[%c16, %c0_5] : memref<64x128xf32, #tpu.memory_space<vmem>>, vector<16x128xf32>
    %cst_6 = arith.constant dense<0.000000e+00> : vector<16x128xf32>
    %5 = tpu.matmul %3, %4, %cst_6 {dimension_numbers = #tpu.dot_dimension_numbers<[1], [0], [0], [1], [0, 0, 1, 1], [], []>} : vector<16x16xf32>, vector<16x128xf32>, vector<16x128xf32> -> vector<16x128xf32>
    %6 = arith.addf %2, %5 : vector<16x128xf32>
    %c0_7 = arith.constant 0 : index
    %c0_8 = arith.constant 0 : index
    %7 = vector.load %arg3[%c0_7, %c0_8] : memref<16x16xf32, #tpu.memory_space<vmem>>, vector<16x16xf32>
    %c32 = arith.constant 32 : index
    %c0_9 = arith.constant 0 : index
    %8 = vector.load %arg5[%c32, %c0_9] : memref<64x128xf32, #tpu.memory_space<vmem>>, vector<16x128xf32>
    %cst_10 = arith.constant dense<0.000000e+00> : vector<16x128xf32>
    %9 = tpu.matmul %7, %8, %cst_10 {dimension_numbers = #tpu.dot_dimension_numbers<[1], [0], [0], [1], [0, 0, 1, 1], [], []>} : vector<16x16xf32>, vector<16x128xf32>, vector<16x128xf32> -> vector<16x128xf32>
    %10 = arith.addf %6, %9 : vector<16x128xf32>
    %c0_11 = arith.constant 0 : index
    %c0_12 = arith.constant 0 : index
    %11 = vector.load %arg4[%c0_11, %c0_12] : memref<16x16xf32, #tpu.memory_space<vmem>>, vector<16x16xf32>
    %c48 = arith.constant 48 : index
    %c0_13 = arith.constant 0 : index
    %12 = vector.load %arg5[%c48, %c0_13] : memref<64x128xf32, #tpu.memory_space<vmem>>, vector<16x128xf32>
    %cst_14 = arith.constant dense<0.000000e+00> : vector<16x128xf32>
    %13 = tpu.matmul %11, %12, %cst_14 {dimension_numbers = #tpu.dot_dimension_numbers<[1], [0], [0], [1], [0, 0, 1, 1], [], []>} : vector<16x16xf32>, vector<16x128xf32>, vector<16x128xf32> -> vector<16x128xf32>
    %14 = arith.addf %10, %13 : vector<16x128xf32>
    %c0_15 = arith.constant 0 : index
    %c0_16 = arith.constant 0 : index
    %15 = vector.load %arg6[%c0_15, %c0_16] : memref<1x128xf32, #tpu.memory_space<vmem>>, vector<1x128xf32>
    %16 = vector.broadcast %15 : vector<1x128xf32> to vector<16x128xf32>
    %17 = arith.addf %14, %16 : vector<16x128xf32>
    %c0_17 = arith.constant 0 : index
    %c0_18 = arith.constant 0 : index
    %18 = vector.load %arg7[%c0_17, %c0_18] : memref<16x128xf32, #tpu.memory_space<vmem>>, vector<16x128xf32>
    tpu.vector_store %arg7[%c0_17, %c0_18], %17 {strides = array<i32>} : memref<16x128xf32, #tpu.memory_space<vmem>>, vector<16x128xf32>,
    return
  }
  func.func @transform_0(%arg0: i32) -> (i32, i32) {
    %c0_i32 = arith.constant 0 : i32
    %c0_i32_0 = arith.constant 0 : i32
    return %arg0, %c0_i32 : i32, i32
  }
  func.func @transform_1(%arg0: i32) -> (i32, i32) {
    %c0_i32 = arith.constant 0 : i32
    %c0_i32_0 = arith.constant 0 : i32
    return %arg0, %c0_i32 : i32, i32
  }
  func.func @transform_2(%arg0: i32) -> (i32, i32) {
    %c0_i32 = arith.constant 0 : i32
    %c0_i32_0 = arith.constant 0 : i32
    return %arg0, %c0_i32 : i32, i32
  }
  func.func @transform_3(%arg0: i32) -> (i32, i32) {
    %c0_i32 = arith.constant 0 : i32
    %c0_i32_0 = arith.constant 0 : i32
    return %arg0, %c0_i32 : i32, i32
  }
  func.func @transform_4(%arg0: i32) -> (i32, i32) {
    %c0_i32 = arith.constant 0 : i32
    %c0_i32_0 = arith.constant 0 : i32
    %c0_i32_1 = arith.constant 0 : i32
    return %c0_i32, %c0_i32_0 : i32, i32
  }
  func.func @transform_5(%arg0: i32) -> (i32, i32) {
    %c0_i32 = arith.constant 0 : i32
    %c0_i32_0 = arith.constant 0 : i32
    %c0_i32_1 = arith.constant 0 : i32
    return %c0_i32, %c0_i32_0 : i32, i32
  }
  func.func @transform_6(%arg0: i32) -> (i32, i32) {
    %c0_i32 = arith.constant 0 : i32
    %c0_i32_0 = arith.constant 0 : i32
    return %arg0, %c0_i32 : i32, i32
  }
}

module attributes {stable_mosaic.version = 11 : i64} {
  func.func @_attn_kernel(%arg0: i32, %arg1: i32, %arg2: memref<1x128x8xf32, #tpu.memory_space<vmem>>, %arg3: memref<1x256x8xf32, #tpu.memory_space<vmem>>, %arg4: memref<1x256x8xf32, #tpu.memory_space<vmem>>, %arg5: memref<1x8x128xf32, #tpu.memory_space<vmem>>) attributes {dimension_semantics = [#tpu.dimension_semantics<parallel>, #tpu.dimension_semantics<parallel>], iteration_bounds = array<i64: 2, 2>, scalar_prefetch = 0 : i64, scratch_operands = 0 : i64, tpu.core_type = #tpu.core_type<tc>, window_params = [{transform_indices = @transform_0, window_bounds = array<i64: 1, 128, 8>}, {transform_indices = @transform_1, window_bounds = array<i64: 1, 256, 8>}, {transform_indices = @transform_2, window_bounds = array<i64: 1, 256, 8>}, {transform_indices = @transform_3, window_bounds = array<i64: 1, 8, 128>}]} {
    %c0 = arith.constant 0 : index
    %c0_0 = arith.constant 0 : index
    %c0_1 = arith.constant 0 : index
    %0 = vector.load %arg2[%c0, %c0_0, %c0_1] : memref<1x128x8xf32, #tpu.memory_space<vmem>>, vector<1x128x8xf32>
    %1 = vector.shape_cast %0 : vector<1x128x8xf32> to vector<128x8xf32>
    %c0_2 = arith.constant 0 : index
    %c0_3 = arith.constant 0 : index
    %c0_4 = arith.constant 0 : index
    %2 = vector.load %arg3[%c0_2, %c0_3, %c0_4] : memref<1x256x8xf32, #tpu.memory_space<vmem>>, vector<1x256x8xf32>
    %3 = vector.shape_cast %2 : vector<1x256x8xf32> to vector<256x8xf32>
    %c0_5 = arith.constant 0 : index
    %c0_6 = arith.constant 0 : index
    %c0_7 = arith.constant 0 : index
    %4 = vector.load %arg4[%c0_5, %c0_6, %c0_7] : memref<1x256x8xf32, #tpu.memory_space<vmem>>, vector<1x256x8xf32>
    %5 = vector.shape_cast %4 : vector<1x256x8xf32> to vector<256x8xf32>
    %6 = vector.extract_strided_slice %1 {offsets = [0, 0], sizes = [128, 4], strides = [1, 1]} : vector<128x8xf32> to vector<128x4xf32>
    %7 = vector.extract_strided_slice %1 {offsets = [0, 4], sizes = [128, 4], strides = [1, 1]} : vector<128x8xf32> to vector<128x4xf32>
    %cst = arith.constant 0.000000e+00 : f32
    %8 = vector.broadcast %cst : f32 to vector<128x4xf32>
    %9 = arith.subf %8, %7 : vector<128x4xf32>
    %10 = tpu.concatenate %6, %9 in 1 : vector<128x4xf32>, vector<128x4xf32> -> vector<128x8xf32>
    %11 = tpu.concatenate %7, %6 in 1 : vector<128x4xf32>, vector<128x4xf32> -> vector<128x8xf32>
    %cst_8 = arith.constant dense<0.000000e+00> : vector<128x256xf32>
    %12 = tpu.matmul %10, %3, %cst_8 {dimension_numbers = #tpu.dot_dimension_numbers<[1], [1], [0], [0], [0, 0, 1, 0], [], []>} : vector<128x8xf32>, vector<256x8xf32>, vector<128x256xf32> -> vector<128x256xf32>
    %cst_9 = arith.constant dense<0.000000e+00> : vector<128x256xf32>
    %13 = tpu.matmul %11, %3, %cst_9 {dimension_numbers = #tpu.dot_dimension_numbers<[1], [1], [0], [0], [0, 0, 1, 0], [], []>} : vector<128x8xf32>, vector<256x8xf32>, vector<128x256xf32> -> vector<128x256xf32>
    %14 = arith.mulf %12, %12 : vector<128x256xf32>
    %15 = arith.mulf %13, %13 : vector<128x256xf32>
    %16 = arith.addf %14, %15 : vector<128x256xf32>
    %17 = math.sqrt %16 : vector<128x256xf32>
    %cst_10 = arith.constant dense<0xFF800000> : vector<128xf32>
    %18 = vector.multi_reduction <maximumf>, %17, %cst_10 [1] : vector<128x256xf32> to vector<128xf32>
    %19 = vector.shape_cast %18 : vector<128xf32> to vector<128x1xf32>
    %20 = vector.broadcast %19 : vector<128x1xf32> to vector<128x256xf32>
    %21 = arith.subf %17, %20 : vector<128x256xf32>
    %22 = math.exp %21 : vector<128x256xf32>
    %cst_11 = arith.constant dense<0.000000e+00> : vector<128xf32>
    %23 = vector.multi_reduction <add>, %22, %cst_11 [1] : vector<128x256xf32> to vector<128xf32>
    %24 = vector.shape_cast %23 : vector<128xf32> to vector<128x1xf32>
    %25 = vector.broadcast %24 : vector<128x1xf32> to vector<128x256xf32>
    %26 = arith.divf %22, %25 : vector<128x256xf32>
    %cst_12 = arith.constant dense<0.000000e+00> : vector<8x128xf32>
    %27 = tpu.matmul %5, %26, %cst_12 {dimension_numbers = #tpu.dot_dimension_numbers<[0], [1], [1], [0], [0, 1, 1, 0], [], []>} : vector<256x8xf32>, vector<128x256xf32>, vector<8x128xf32> -> vector<8x128xf32>
    %c0_13 = arith.constant 0 : index
    %c0_14 = arith.constant 0 : index
    %c0_15 = arith.constant 0 : index
    %28 = vector.load %arg5[%c0_13, %c0_14, %c0_15] : memref<1x8x128xf32, #tpu.memory_space<vmem>>, vector<1x8x128xf32>
    %29 = vector.shape_cast %28 : vector<1x8x128xf32> to vector<8x128xf32>
    %30 = vector.shape_cast %27 : vector<8x128xf32> to vector<1x8x128xf32>
    tpu.vector_store %arg5[%c0_13, %c0_14, %c0_15], %30 {strides = array<i32>} : memref<1x8x128xf32, #tpu.memory_space<vmem>>, vector<1x8x128xf32>,
    return
  }
  func.func @transform_0(%arg0: i32, %arg1: i32) -> (i32, i32, i32) {
    %c0_i32 = arith.constant 0 : i32
    %c0_i32_0 = arith.constant 0 : i32
    return %arg0, %arg1, %c0_i32 : i32, i32, i32
  }
  func.func @transform_1(%arg0: i32, %arg1: i32) -> (i32, i32, i32) {
    %c0_i32 = arith.constant 0 : i32
    %c0_i32_0 = arith.constant 0 : i32
    %c0_i32_1 = arith.constant 0 : i32
    return %arg0, %c0_i32, %c0_i32_0 : i32, i32, i32
  }
  func.func @transform_2(%arg0: i32, %arg1: i32) -> (i32, i32, i32) {
    %c0_i32 = arith.constant 0 : i32
    %c0_i32_0 = arith.constant 0 : i32
    %c0_i32_1 = arith.constant 0 : i32
    return %arg0, %c0_i32, %c0_i32_0 : i32, i32, i32
  }
  func.func @transform_3(%arg0: i32, %arg1: i32) -> (i32, i32, i32) {
    %c0_i32 = arith.constant 0 : i32
    %c0_i32_0 = arith.constant 0 : i32
    return %arg0, %c0_i32, %arg1 : i32, i32, i32
  }
}

</mosaic_0001>

<llo_original>
// kernel: fourier_cross_attention.2
$region0: #{fourier_cross_attention.2}
  #allocation0 [shape = 'u32[]', space=smem, size = 0x4, offset = 0x4, fixed_abs, tag = 'smem constant byte address 0x4 - core index']
  #allocation1 [shape = 'u32[144,128]{1,0:T(1,128)}', space=vmem, size = 0x12000, scoped, tag = 'internal scratch']
  %s0 = inlined_call_operand.vmem [shape: f32[128,16], index: 0, kind: input, shape index: {}]
  %s1 = inlined_call_operand.vmem [shape: f32[128,16], index: 1, kind: input, shape index: {}]
  %s2 = inlined_call_operand.vmem [shape: f32[128,16], index: 2, kind: input, shape index: {}]
  %s3 = inlined_call_operand.vmem [shape: f32[128,16], index: 3, kind: input, shape index: {}]
  %s4 = inlined_call_operand.vmem [shape: f32[64,128], index: 4, kind: input, shape index: {}]
  %s5 = inlined_call_operand.vmem [shape: f32[1,128], index: 5, kind: input, shape index: {}]
  %s6 = inlined_call_operand.vmem [shape: f32[128,128], index: 6, kind: output, shape index: {}]
  %s7 = sld [smem:[#allocation0]]
  $region57: #{fourier_cross_attention.2} parent=0
    _
  %s9 = ssub.s32 1, %s7
  %s10 = scalar_select 0, %s9, %s7
  loop: start=0, step=1, limit=10
  $region2: #{fourier_cross_attention.2} parent=0 // loop_pre_header
    _
  $region3: #{fourier_cross_attention.2} parent=0 // loop_header
    %s12 = sphi 0, %s16
    %p13 = scmp.ge.s32.totalorder %s12, 10
    %s22 = sphi 0, %s24
    %s25 = sphi 0, %s22
    %s26 = sphi 0, %s25
    %s42 = sphi 0, %s26
    %s48 = sphi 0, %s50
    %s51 = sphi 0, %s48
    %s52 = sphi 0, %s51
    %s68 = sphi 0, %s52
    %s74 = sphi 0, %s76
    %s77 = sphi 0, %s74
    %s78 = sphi 0, %s77
    %s94 = sphi 0, %s78
    %s100 = sphi 0, %s102
    %s103 = sphi 0, %s100
    %s104 = sphi 0, %s103
    %s120 = sphi 0, %s104
    %s124 = sphi 0, %s124
    %s126 = sphi 0, %s124
    %s127 = sphi 0, %s126
    %s141 = sphi 0, %s127
    %s145 = sphi 0, %s145
    %s147 = sphi 0, %s145
    %s148 = sphi 0, %s147
    %s162 = sphi 0, %s148
    %s168 = sphi 0, %s170
    %s171 = sphi 0, %s168
    %s172 = sphi 0, %s171
    %s188 = sphi 0, %s172
  $region4: #{fourier_cross_attention.2} parent=0 // loop_header_branch
    %15 = sbr.rel (%p13) target = $region8
  $region5: #{fourier_cross_attention.2} parent=0 // loop_body
    %s17 = ssub.s32 %s12, 1
    %s18 = ssub.s32 %s12, 2
    %s19 = sadd.s32 %s12, 1
    %s20 = ssub.s32 %s12, %s19
    %p21 = scmp.eq.s32.totalorder %s20, 0
    %s23 = sadd.s32 %s22, 1
    %s24 = scalar_select %p21, %s22, %s23
    %p27 = pneg %p21
    %p28 = scmp.eq.s32.totalorder %s12, 7
    %p29 = por %p27, %p28
    %p30 = scmp.ne.s32.totalorder %s22, %s25
    %p31 = scmp.eq.s32.totalorder %s12, 0
    %p32 = por %p30, %p31
    %p33 = scmp.ne.s32.totalorder %s22, %s25
    %p34 = scmp.eq.s32.totalorder %s17, 7
    %p35 = por %p33, %p34
    %p36 = scmp.ne.s32.totalorder %s25, %s26
    %p37 = scmp.eq.s32.totalorder %s17, 0
    %p38 = por %p36, %p37
    %p39 = scmp.ne.s32.totalorder %s25, %s26
    %p40 = scmp.eq.s32.totalorder %s18, 7
    %p41 = por %p39, %p40
    %p43 = scmp.ne.s32.totalorder %s26, %s42
    %p44 = scmp.eq.s32.totalorder %s18, 0
    %p45 = por %p43, %p44
    %s46 = ssub.s32 %s12, %s19
    %p47 = scmp.eq.s32.totalorder %s46, 0
    %s49 = sadd.s32 %s48, 1
    %s50 = scalar_select %p47, %s48, %s49
    %p53 = pneg %p47
    %p54 = scmp.eq.s32.totalorder %s12, 7
    %p55 = por %p53, %p54
    %p56 = scmp.ne.s32.totalorder %s48, %s51
    %p57 = scmp.eq.s32.totalorder %s12, 0
    %p58 = por %p56, %p57
    %p59 = scmp.ne.s32.totalorder %s48, %s51
    %p60 = scmp.eq.s32.totalorder %s17, 7
    %p61 = por %p59, %p60
    %p62 = scmp.ne.s32.totalorder %s51, %s52
    %p63 = scmp.eq.s32.totalorder %s17, 0
    %p64 = por %p62, %p63
    %p65 = scmp.ne.s32.totalorder %s51, %s52
    %p66 = scmp.eq.s32.totalorder %s18, 7
    %p67 = por %p65, %p66
    %p69 = scmp.ne.s32.totalorder %s52, %s68
    %p70 = scmp.eq.s32.totalorder %s18, 0
    %p71 = por %p69, %p70
    %s72 = ssub.s32 %s12, %s19
    %p73 = scmp.eq.s32.totalorder %s72, 0
    %s75 = sadd.s32 %s74, 1
    %s76 = scalar_select %p73, %s74, %s75
    %p79 = pneg %p73
    %p80 = scmp.eq.s32.totalorder %s12, 7
    %p81 = por %p79, %p80
    %p82 = scmp.ne.s32.totalorder %s74, %s77
    %p83 = scmp.eq.s32.totalorder %s12, 0
    %p84 = por %p82, %p83
    %p85 = scmp.ne.s32.totalorder %s74, %s77
    %p86 = scmp.eq.s32.totalorder %s17, 7
    %p87 = por %p85, %p86
    %p88 = scmp.ne.s32.totalorder %s77, %s78
    %p89 = scmp.eq.s32.totalorder %s17, 0
    %p90 = por %p88, %p89
    %p91 = scmp.ne.s32.totalorder %s77, %s78
    %p92 = scmp.eq.s32.totalorder %s18, 7
    %p93 = por %p91, %p92
    %p95 = scmp.ne.s32.totalorder %s78, %s94
    %p96 = scmp.eq.s32.totalorder %s18, 0
    %p97 = por %p95, %p96
    %s98 = ssub.s32 %s12, %s19
    %p99 = scmp.eq.s32.totalorder %s98, 0
    %s101 = sadd.s32 %s100, 1
    %s102 = scalar_select %p99, %s100, %s101
    %p105 = pneg %p99
    %p106 = scmp.eq.s32.totalorder %s12, 7
    %p107 = por %p105, %p106
    %p108 = scmp.ne.s32.totalorder %s100, %s103
    %p109 = scmp.eq.s32.totalorder %s12, 0
    %p110 = por %p108, %p109
    %p111 = scmp.ne.s32.totalorder %s100, %s103
    %p112 = scmp.eq.s32.totalorder %s17, 7
    %p113 = por %p111, %p112
    %p114 = scmp.ne.s32.totalorder %s103, %s104
    %p115 = scmp.eq.s32.totalorder %s17, 0
    %p116 = por %p114, %p115
    %p117 = scmp.ne.s32.totalorder %s103, %s104
    %p118 = scmp.eq.s32.totalorder %s18, 7
    %p119 = por %p117, %p118
    %p121 = scmp.ne.s32.totalorder %s104, %s120
    %p122 = scmp.eq.s32.totalorder %s18, 0
    %p123 = por %p121, %p122
    %s125 = sadd.s32 %s124, 1
    %p128 = scmp.eq.s32.totalorder %s12, 7
    %p129 = scmp.ne.s32.totalorder %s124, %s126
    %p130 = scmp.eq.s32.totalorder %s12, 0
    %p131 = por %p129, %p130
    %p132 = scmp.ne.s32.totalorder %s124, %s126
    %p133 = scmp.eq.s32.totalorder %s17, 7
    %p134 = por %p132, %p133
    %p135 = scmp.ne.s32.totalorder %s126, %s127
    %p136 = scmp.eq.s32.totalorder %s17, 0
    %p137 = por %p135, %p136
    %p138 = scmp.ne.s32.totalorder %s126, %s127
    %p139 = scmp.eq.s32.totalorder %s18, 7
    %p140 = por %p138, %p139
    %p142 = scmp.ne.s32.totalorder %s127, %s141
    %p143 = scmp.eq.s32.totalorder %s18, 0
    %p144 = por %p142, %p143
    %s146 = sadd.s32 %s145, 1
    %p149 = scmp.eq.s32.totalorder %s12, 7
    %p150 = scmp.ne.s32.totalorder %s145, %s147
    %p151 = scmp.eq.s32.totalorder %s12, 0
    %p152 = por %p150, %p151
    %p153 = scmp.ne.s32.totalorder %s145, %s147
    %p154 = scmp.eq.s32.totalorder %s17, 7
    %p155 = por %p153, %p154
    %p156 = scmp.ne.s32.totalorder %s147, %s148
    %p157 = scmp.eq.s32.totalorder %s17, 0
    %p158 = por %p156, %p157
    %p159 = scmp.ne.s32.totalorder %s147, %s148
    %p160 = scmp.eq.s32.totalorder %s18, 7
    %p161 = por %p159, %p160
    %p163 = scmp.ne.s32.totalorder %s148, %s162
    %p164 = scmp.eq.s32.totalorder %s18, 0
    %p165 = por %p163, %p164
    %s166 = ssub.s32 %s12, %s19
    %p167 = scmp.eq.s32.totalorder %s166, 0
    %s169 = sadd.s32 %s168, 1
    %s170 = scalar_select %p167, %s168, %s169
    %p173 = pneg %p167
    %p174 = scmp.eq.s32.totalorder %s12, 7
    %p175 = por %p173, %p174
    %p176 = scmp.ne.s32.totalorder %s168, %s171
    %p177 = scmp.eq.s32.totalorder %s12, 0
    %p178 = por %p176, %p177
    %p179 = scmp.ne.s32.totalorder %s168, %s171
    %p180 = scmp.eq.s32.totalorder %s17, 7
    %p181 = por %p179, %p180
    %p182 = scmp.ne.s32.totalorder %s171, %s172
    %p183 = scmp.eq.s32.totalorder %s17, 0
    %p184 = por %p182, %p183
    %p185 = scmp.ne.s32.totalorder %s171, %s172
    %p186 = scmp.eq.s32.totalorder %s18, 7
    %p187 = por %p185, %p186
    %p189 = scmp.ne.s32.totalorder %s172, %s188
    %p190 = scmp.eq.s32.totalorder %s18, 0
    %p191 = por %p189, %p190
    %p192 = scmp.le.s32.totalorder 1, %s12
    %p193 = scmp.lt.s32.totalorder %s12, 9
    %p194 = pnand %p192, %p193
    %p195 = pneg %p194
    // Predicated region
    $region9: #{fourier_cross_attention.2} parent=5 // pred_check
      _
    $region10: #{fourier_cross_attention.2} parent=5 // pred_check_branch
      %197 = sbr.rel (%p194) target = $region12
    $region11: #{fourier_cross_attention.2} parent=5 // pred_region
      %s198 = ssub.s32 %s12, 1
      // Predicated region
      $region13: #{fourier_cross_attention.2} parent=11 // pred_check
        %p199 = pneg %p137
      $region14: #{fourier_cross_attention.2} parent=11 // pred_check_branch
        %201 = sbr.rel (%p199) target = $region16
      $region15: #{fourier_cross_attention.2} parent=11 // pred_region
        _
      $region16: #{fourier_cross_attention.2} parent=11 // pred_fallthru
        _
      // Predicated region
      $region17: #{fourier_cross_attention.2} parent=11 // pred_check
        %p202 = pneg %p158
      $region18: #{fourier_cross_attention.2} parent=11 // pred_check_branch
        %204 = sbr.rel (%p202) target = $region20
      $region19: #{fourier_cross_attention.2} parent=11 // pred_region
        _
      $region20: #{fourier_cross_attention.2} parent=11 // pred_fallthru
        _
    $region12: #{fourier_cross_attention.2} parent=5 // pred_fallthru
      _
    %p205 = scmp.lt.s32.totalorder %s12, 8
    // Predicated region
    $region21: #{fourier_cross_attention.2} parent=5 // pred_check
      %p206 = pneg %p205
    $region22: #{fourier_cross_attention.2} parent=5 // pred_check_branch
      %208 = sbr.rel (%p206) target = $region24
    $region23: #{fourier_cross_attention.2} parent=5 // pred_region
      // Predicated region
      $region25: #{fourier_cross_attention.2} parent=23 // pred_check
        %p209 = pneg %p32
      $region26: #{fourier_cross_attention.2} parent=23 // pred_check_branch
        %211 = sbr.rel (%p209) target = $region28
      $region27: #{fourier_cross_attention.2} parent=23 // pred_region
        %s212 = smul.u32 2, %s12
        %p213 = scmp.lt.s32.totalorder %s212, 15
        %s214 = scalar_select %p213, %s212, 15
        %s215 = smul.addr %s214, 8
        %s216 = scalar_lea.vmem %s0, %s215
        %s217 = smul.u32 2, %s12
      $region28: #{fourier_cross_attention.2} parent=23 // pred_fallthru
        _
      // Predicated region
      $region29: #{fourier_cross_attention.2} parent=23 // pred_check
        %p218 = pneg %p58
      $region30: #{fourier_cross_attention.2} parent=23 // pred_check_branch
        %220 = sbr.rel (%p218) target = $region32
      $region31: #{fourier_cross_attention.2} parent=23 // pred_region
        %s221 = smul.u32 2, %s12
        %p222 = scmp.lt.s32.totalorder %s221, 15
        %s223 = scalar_select %p222, %s221, 15
        %s224 = smul.addr %s223, 8
        %s225 = scalar_lea.vmem %s1, %s224
        %s226 = smul.u32 2, %s12
      $region32: #{fourier_cross_attention.2} parent=23 // pred_fallthru
        _
      // Predicated region
      $region33: #{fourier_cross_attention.2} parent=23 // pred_check
        %p227 = pneg %p84
      $region34: #{fourier_cross_attention.2} parent=23 // pred_check_branch
        %229 = sbr.rel (%p227) target = $region36
      $region35: #{fourier_cross_attention.2} parent=23 // pred_region
        %s230 = smul.u32 2, %s12
        %p231 = scmp.lt.s32.totalorder %s230, 15
        %s232 = scalar_select %p231, %s230, 15
        %s233 = smul.addr %s232, 8
        %s234 = scalar_lea.vmem %s2, %s233
        %s235 = smul.u32 2, %s12
      $region36: #{fourier_cross_attention.2} parent=23 // pred_fallthru
        _
      // Predicated region
      $region37: #{fourier_cross_attention.2} parent=23 // pred_check
        %p236 = pneg %p110
      $region38: #{fourier_cross_attention.2} parent=23 // pred_check_branch
        %238 = sbr.rel (%p236) target = $region40
      $region39: #{fourier_cross_attention.2} parent=23 // pred_region
        %s239 = smul.u32 2, %s12
        %p240 = scmp.lt.s32.totalorder %s239, 15
        %s241 = scalar_select %p240, %s239, 15
        %s242 = smul.addr %s241, 8
        %s243 = scalar_lea.vmem %s3, %s242
        %s244 = smul.u32 2, %s12
      $region40: #{fourier_cross_attention.2} parent=23 // pred_fallthru
        _
    $region24: #{fourier_cross_attention.2} parent=5 // pred_fallthru
      _
    %p245 = scmp.le.s32.totalorder 1, %s12
    %p246 = scmp.lt.s32.totalorder %s12, 9
    %p247 = pnand %p245, %p246
    %p248 = pneg %p247
    // Predicated region
    $region41: #{fourier_cross_attention.2} parent=5 // pred_check
      _
    $region42: #{fourier_cross_attention.2} parent=5 // pred_check_branch
      %250 = sbr.rel (%p247) target = $region44
    $region43: #{fourier_cross_attention.2} parent=5 // pred_region
      %s251 = ssub.s32 %s12, 1
      %s252 = smul.u32 2, %s17
      %p253 = scmp.lt.s32.totalorder %s252, 15
      %s254 = scalar_select %p253, %s252, 15
      %s255 = smul.addr %s254, 8
      %s256 = scalar_lea.vmem %s0, %s255
      %p257 = pneg %p38
      %p258 = pneg %p35
      %s259 = smul.u32 2, %s17
      %p260 = scmp.lt.s32.totalorder %s259, 15
      %s261 = scalar_select %p260, %s259, 15
      %s262 = smul.addr %s261, 8
      %s263 = scalar_lea.vmem %s1, %s262
      %p264 = pneg %p64
      %p265 = pneg %p61
      %s266 = smul.u32 2, %s17
      %p267 = scmp.lt.s32.totalorder %s266, 15
      %s268 = scalar_select %p267, %s266, 15
      %s269 = smul.addr %s268, 8
      %s270 = scalar_lea.vmem %s2, %s269
      %p271 = pneg %p90
      %p272 = pneg %p87
      %s273 = smul.u32 2, %s17
      %p274 = scmp.lt.s32.totalorder %s273, 15
      %s275 = scalar_select %p274, %s273, 15
      %s276 = smul.addr %s275, 8
      %s277 = scalar_lea.vmem %s3, %s276
      %p278 = pneg %p116
      %p279 = pneg %p113
      %p280 = pneg %p137
      %p281 = pneg %p134
      %p282 = pneg %p158
      %p283 = pneg %p155
      %p284 = pneg %p184
      %p285 = pneg %p181
      %s286 = smul.u32 2, %s17
      %p287 = scmp.lt.s32.totalorder %s286, 15
      %s288 = scalar_select %p287, %s286, 15
      %s289 = smul.addr %s288, 8
      %s290 = scalar_lea.vmem %s6, %s289
      %s291 = smul.u32 2, %s17
      %p292 = scmp.lt.s32.totalorder %s291, 15
      %s293 = scalar_select %p292, %s291, 15
      %s294 = smul.addr %s293, 8
      %s295 = scalar_lea.vmem %s0, %s294
      %s296 = smul.u32 2, %s17
      %s297 = smul.u32 2, %s17
      %p298 = scmp.lt.s32.totalorder %s297, 15
      %s299 = scalar_select %p298, %s297, 15
      %s300 = smul.addr %s299, 8
      %s301 = scalar_lea.vmem %s1, %s300
      %s302 = smul.u32 2, %s17
      %s303 = smul.u32 2, %s17
      %p304 = scmp.lt.s32.totalorder %s303, 15
      %s305 = scalar_select %p304, %s303, 15
      %s306 = smul.addr %s305, 8
      %s307 = scalar_lea.vmem %s2, %s306
      %s308 = smul.u32 2, %s17
      %s309 = smul.u32 2, %s17
      %p310 = scmp.lt.s32.totalorder %s309, 15
      %s311 = scalar_select %p310, %s309, 15
      %s312 = smul.addr %s311, 8
      %s313 = scalar_lea.vmem %s3, %s312
      %s314 = smul.u32 2, %s17
      %s315 = smul.u32 2, %s17
      %p316 = scmp.lt.s32.totalorder %s315, 15
      %s317 = scalar_select %p316, %s315, 15
      %s318 = smul.addr %s317, 8
      %s319 = scalar_lea.vmem %s6, %s318
      %s320 = smul.u32 2, %s17
      %v321 = vld [vmem:[%s295] sm:$0xff]
      %v322 = vld [vmem:[%s295 + $0x8] sm:$0xff]
      %v323 = vld [vmem:[%s4] sm:$0xff]
      %v324 = vld [vmem:[%s4 + $0x8] sm:$0xff]
      %v325 = vld [vmem:[%s301] sm:$0xff]
      %v326 = vld [vmem:[%s301 + $0x8] sm:$0xff]
      %v327 = vld [vmem:[%s4 + $0x10] sm:$0xff]
      %v328 = vld [vmem:[%s4 + $0x18] sm:$0xff]
      %vm329 = vcmask 130048
      %v331 = vsel %vm329, %v325, 0
      %v334 = vsel %vm329, %v326, 0
      %336 = vmatprep.subr.mxu0 0.0
      %337 = vmatpush1.msra.mxu0 %v327
      %338 = vmatprep.subr.mxu0 0.0
      %339 = vmatpush1.msra.mxu0 %v328
      %340 = vmatprep.subr.mxu0 0.0
      %341 = vmatpush1.msra.mxu0 0.0
      %342 = vmatprep.subr.mxu0 0.0
      %343 = vmatpush1.msra.mxu0 0.0
      %344 = vmatprep.subr.mxu0 0.0
      %345 = vmatpush1.msra.mxu0 0.0
      %346 = vmatprep.subr.mxu0 0.0
      %347 = vmatpush1.msra.mxu0 0.0
      %348 = vmatprep.subr.mxu0 0.0
      %349 = vmatpush1.msra.mxu0 0.0
      %350 = vmatprep.subr.mxu0 0.0
      %351 = vmatpush1.msra.mxu0 0.0
      %352 = vmatprep.subr.mxu0 0.0
      %353 = vmatpush1.msra.mxu0 0.0
      %354 = vmatprep.subr.mxu0 0.0
      %355 = vmatpush1.msra.mxu0 0.0
      %356 = vmatprep.subr.mxu0 0.0
      %357 = vmatpush1.msra.mxu0 0.0
      %358 = vmatprep.subr.mxu0 0.0
      %359 = vmatpush1.msra.mxu0 0.0
      %360 = vmatprep.subr.mxu0 0.0
      %361 = vmatpush1.msra.mxu0 0.0
      %362 = vmatprep.subr.mxu0 0.0
      %363 = vmatpush1.msra.mxu0 0.0
      %364 = vmatprep.subr.mxu0 0.0
      %365 = vmatpush1.msra.mxu0 0.0
      %366 = vmatprep.subr.mxu0 0.0
      %367 = vmatpush1.msra.mxu0 0.0
      %368 = vmatprep.subr.mxu0 0.0
      %369 = vmatpush1.msra.mxu0 0.0
      %370 = vmatprep.subr.mxu0 0.0
      %371 = vmatpush1.msra.mxu0 0.0
      %372 = vmatprep.subr.mxu0 0.0
      %373 = vmatpush1.msra.mxu0 0.0
      %374 = vmatprep.subr.mxu0 0.0
      %375 = vmatpush1.msra.mxu0 0.0
      %376 = vmatprep.subr.mxu0 0.0
      %377 = vmatpush1.msra.mxu0 0.0
      %378 = vmatprep.subr.mxu0 0.0
      %379 = vmatpush1.msra.mxu0 0.0
      %380 = vmatprep.subr.mxu0 0.0
      %381 = vmatpush1.msra.mxu0 0.0
      %382 = vmatprep.subr.mxu0 0.0
      %383 = vmatpush1.msra.mxu0 0.0
      %384 = vmatprep.subr.mxu0 0.0
      %385 = vmatpush1.msra.mxu0 0.0
      %386 = vmatprep.subr.mxu0 0.0
      %387 = vmatpush1.msra.mxu0 0.0
      %388 = vmatprep.subr.mxu0 0.0
      %389 = vmatpush1.msra.mxu0 0.0
      %390 = vmatprep.subr.mxu0 0.0
      %391 = vmatpush1.msra.mxu0 0.0
      %392 = vmatprep.subr.mxu0 0.0
      %393 = vmatpush1.msra.mxu0 0.0
      %394 = vmatprep.subr.mxu0 0.0
      %395 = vmatpush1.msra.mxu0 0.0
      %396 = vmatprep.subr.mxu0 0.0
      %397 = vmatpush1.msra.mxu0 0.0
      %398 = vmatprep.subr.mxu0 0.0
      %399 = vmatpush1.msra.mxu0 0.0
      %400 = vmatprep.mubr.f32.mxu0 0.0
      %401 = vmatmul.mubr.f32.gmra.mrb[0].mxu0 %v331
      %v402 = vpop.f32.mrb[0].mxu0
      %v403 = vadd.f32 0.0, %v402
      %v404 = vpop.f32.mrb[0].mxu0
      %405 = vmatprep.mubr.f32.mxu0 0.0
      %406 = vmatmul.mubr.f32.gmra.mrb[0].mxu0 %v334
      %v407 = vpop.f32.mrb[0].mxu0
      %v408 = vadd.f32 0.0, %v407
      %v409 = vpop.f32.mrb[0].mxu0
      %410 = vdwg.mxu0
      %v412 = vsel %vm329, %v321, 0
      %v415 = vsel %vm329, %v322, 0
      %417 = vmatprep.subr.mxu0 0.0
      %418 = vmatpush1.msra.mxu0 %v323
      %419 = vmatprep.subr.mxu0 0.0
      %420 = vmatpush1.msra.mxu0 %v324
      %421 = vmatprep.subr.mxu0 0.0
      %422 = vmatpush1.msra.mxu0 0.0
      %423 = vmatprep.subr.mxu0 0.0
      %424 = vmatpush1.msra.mxu0 0.0
      %425 = vmatprep.subr.mxu0 0.0
      %426 = vmatpush1.msra.mxu0 0.0
      %427 = vmatprep.subr.mxu0 0.0
      %428 = vmatpush1.msra.mxu0 0.0
      %429 = vmatprep.subr.mxu0 0.0
      %430 = vmatpush1.msra.mxu0 0.0
      %431 = vmatprep.subr.mxu0 0.0
      %432 = vmatpush1.msra.mxu0 0.0
      %433 = vmatprep.subr.mxu0 0.0
      %434 = vmatpush1.msra.mxu0 0.0
      %435 = vmatprep.subr.mxu0 0.0
      %436 = vmatpush1.msra.mxu0 0.0
      %437 = vmatprep.subr.mxu0 0.0
      %438 = vmatpush1.msra.mxu0 0.0
      %439 = vmatprep.subr.mxu0 0.0
      %440 = vmatpush1.msra.mxu0 0.0
      %441 = vmatprep.subr.mxu0 0.0
      %442 = vmatpush1.msra.mxu0 0.0
      %443 = vmatprep.subr.mxu0 0.0
      %444 = vmatpush1.msra.mxu0 0.0
      %445 = vmatprep.subr.mxu0 0.0
      %446 = vmatpush1.msra.mxu0 0.0
      %447 = vmatprep.subr.mxu0 0.0
      %448 = vmatpush1.msra.mxu0 0.0
      %449 = vmatprep.subr.mxu0 0.0
      %450 = vmatpush1.msra.mxu0 0.0
      %451 = vmatprep.subr.mxu0 0.0
      %452 = vmatpush1.msra.mxu0 0.0
      %453 = vmatprep.subr.mxu0 0.0
      %454 = vmatpush1.msra.mxu0 0.0
      %455 = vmatprep.subr.mxu0 0.0
      %456 = vmatpush1.msra.mxu0 0.0
      %457 = vmatprep.subr.mxu0 0.0
      %458 = vmatpush1.msra.mxu0 0.0
      %459 = vmatprep.subr.mxu0 0.0
      %460 = vmatpush1.msra.mxu0 0.0
      %461 = vmatprep.subr.mxu0 0.0
      %462 = vmatpush1.msra.mxu0 0.0
      %463 = vmatprep.subr.mxu0 0.0
      %464 = vmatpush1.msra.mxu0 0.0
      %465 = vmatprep.subr.mxu0 0.0
      %466 = vmatpush1.msra.mxu0 0.0
      %467 = vmatprep.subr.mxu0 0.0
      %468 = vmatpush1.msra.mxu0 0.0
      %469 = vmatprep.subr.mxu0 0.0
      %470 = vmatpush1.msra.mxu0 0.0
      %471 = vmatprep.subr.mxu0 0.0
      %472 = vmatpush1.msra.mxu0 0.0
      %473 = vmatprep.subr.mxu0 0.0
      %474 = vmatpush1.msra.mxu0 0.0
      %475 = vmatprep.subr.mxu0 0.0
      %476 = vmatpush1.msra.mxu0 0.0
      %477 = vmatprep.subr.mxu0 0.0
      %478 = vmatpush1.msra.mxu0 0.0
      %479 = vmatprep.subr.mxu0 0.0
      %480 = vmatpush1.msra.mxu0 0.0
      %481 = vmatprep.mubr.f32.mxu0 0.0
      %482 = vmatmul.mubr.f32.gmra.mrb[0].mxu0 %v412
      %v483 = vpop.f32.mrb[0].mxu0
      %v484 = vadd.f32 %v403, %v483
      %v485 = vpop.f32.mrb[0].mxu0
      %486 = vmatprep.mubr.f32.mxu0 0.0
      %487 = vmatmul.mubr.f32.gmra.mrb[0].mxu0 %v415
      %v488 = vpop.f32.mrb[0].mxu0
      %v489 = vadd.f32 %v408, %v488
      %v490 = vpop.f32.mrb[0].mxu0
      %491 = vdwg.mxu0
      %v492 = vld [vmem:[%s307] sm:$0xff]
      %v493 = vld [vmem:[%s307 + $0x8] sm:$0xff]
      %v494 = vld [vmem:[%s4 + $0x20] sm:$0xff]
      %v495 = vld [vmem:[%s4 + $0x28] sm:$0xff]
      %v497 = vsel %vm329, %v492, 0
      %v500 = vsel %vm329, %v493, 0
      %502 = vmatprep.subr.mxu0 0.0
      %503 = vmatpush1.msra.mxu0 %v494
      %504 = vmatprep.subr.mxu0 0.0
      %505 = vmatpush1.msra.mxu0 %v495
      %506 = vmatprep.subr.mxu0 0.0
      %507 = vmatpush1.msra.mxu0 0.0
      %508 = vmatprep.subr.mxu0 0.0
      %509 = vmatpush1.msra.mxu0 0.0
      %510 = vmatprep.subr.mxu0 0.0
      %511 = vmatpush1.msra.mxu0 0.0
      %512 = vmatprep.subr.mxu0 0.0
      %513 = vmatpush1.msra.mxu0 0.0
      %514 = vmatprep.subr.mxu0 0.0
      %515 = vmatpush1.msra.mxu0 0.0
      %516 = vmatprep.subr.mxu0 0.0
      %517 = vmatpush1.msra.mxu0 0.0
      %518 = vmatprep.subr.mxu0 0.0
      %519 = vmatpush1.msra.mxu0 0.0
      %520 = vmatprep.subr.mxu0 0.0
      %521 = vmatpush1.msra.mxu0 0.0
      %522 = vmatprep.subr.mxu0 0.0
      %523 = vmatpush1.msra.mxu0 0.0
      %524 = vmatprep.subr.mxu0 0.0
      %525 = vmatpush1.msra.mxu0 0.0
      %526 = vmatprep.subr.mxu0 0.0
      %527 = vmatpush1.msra.mxu0 0.0
      %528 = vmatprep.subr.mxu0 0.0
      %529 = vmatpush1.msra.mxu0 0.0
      %530 = vmatprep.subr.mxu0 0.0
      %531 = vmatpush1.msra.mxu0 0.0
      %532 = vmatprep.subr.mxu0 0.0
      %533 = vmatpush1.msra.mxu0 0.0
      %534 = vmatprep.subr.mxu0 0.0
      %535 = vmatpush1.msra.mxu0 0.0
      %536 = vmatprep.subr.mxu0 0.0
      %537 = vmatpush1.msra.mxu0 0.0
      %538 = vmatprep.subr.mxu0 0.0
      %539 = vmatpush1.msra.mxu0 0.0
      %540 = vmatprep.subr.mxu0 0.0
      %541 = vmatpush1.msra.mxu0 0.0
      %542 = vmatprep.subr.mxu0 0.0
      %543 = vmatpush1.msra.mxu0 0.0
      %544 = vmatprep.subr.mxu0 0.0
      %545 = vmatpush1.msra.mxu0 0.0
      %546 = vmatprep.subr.mxu0 0.0
      %547 = vmatpush1.msra.mxu0 0.0
      %548 = vmatprep.subr.mxu0 0.0
      %549 = vmatpush1.msra.mxu0 0.0
      %550 = vmatprep.subr.mxu0 0.0
      %551 = vmatpush1.msra.mxu0 0.0
      %552 = vmatprep.subr.mxu0 0.0
      %553 = vmatpush1.msra.mxu0 0.0
      %554 = vmatprep.subr.mxu0 0.0
      %555 = vmatpush1.msra.mxu0 0.0
      %556 = vmatprep.subr.mxu0 0.0
      %557 = vmatpush1.msra.mxu0 0.0
      %558 = vmatprep.subr.mxu0 0.0
      %559 = vmatpush1.msra.mxu0 0.0
      %560 = vmatprep.subr.mxu0 0.0
      %561 = vmatpush1.msra.mxu0 0.0
      %562 = vmatprep.subr.mxu0 0.0
      %563 = vmatpush1.msra.mxu0 0.0
      %564 = vmatprep.subr.mxu0 0.0
      %565 = vmatpush1.msra.mxu0 0.0
      %566 = vmatprep.mubr.f32.mxu0 0.0
      %567 = vmatmul.mubr.f32.gmra.mrb[0].mxu0 %v497
      %v568 = vpop.f32.mrb[0].mxu0
      %v569 = vadd.f32 0.0, %v568
      %v570 = vpop.f32.mrb[0].mxu0
      %571 = vmatprep.mubr.f32.mxu0 0.0
      %572 = vmatmul.mubr.f32.gmra.mrb[0].mxu0 %v500
      %v573 = vpop.f32.mrb[0].mxu0
      %v574 = vadd.f32 0.0, %v573
      %v575 = vpop.f32.mrb[0].mxu0
      %576 = vdwg.mxu0
      %v577 = vadd.f32 %v484, %v569
      %v578 = vadd.f32 %v489, %v574
      %v579 = vld [vmem:[%s313] sm:$0xff]
      %v580 = vld [vmem:[%s313 + $0x8] sm:$0xff]
      %v581 = vld [vmem:[%s4 + $0x30] sm:$0xff]
      %v582 = vld [vmem:[%s4 + $0x38] sm:$0xff]
      %v584 = vsel %vm329, %v579, 0
      %v587 = vsel %vm329, %v580, 0
      %589 = vmatprep.subr.mxu0 0.0
      %590 = vmatpush1.msra.mxu0 %v581
      %591 = vmatprep.subr.mxu0 0.0
      %592 = vmatpush1.msra.mxu0 %v582
      %593 = vmatprep.subr.mxu0 0.0
      %594 = vmatpush1.msra.mxu0 0.0
      %595 = vmatprep.subr.mxu0 0.0
      %596 = vmatpush1.msra.mxu0 0.0
      %597 = vmatprep.subr.mxu0 0.0
      %598 = vmatpush1.msra.mxu0 0.0
      %599 = vmatprep.subr.mxu0 0.0
      %600 = vmatpush1.msra.mxu0 0.0
      %601 = vmatprep.subr.mxu0 0.0
      %602 = vmatpush1.msra.mxu0 0.0
      %603 = vmatprep.subr.mxu0 0.0
      %604 = vmatpush1.msra.mxu0 0.0
      %605 = vmatprep.subr.mxu0 0.0
      %606 = vmatpush1.msra.mxu0 0.0
      %607 = vmatprep.subr.mxu0 0.0
      %608 = vmatpush1.msra.mxu0 0.0
      %609 = vmatprep.subr.mxu0 0.0
      %610 = vmatpush1.msra.mxu0 0.0
      %611 = vmatprep.subr.mxu0 0.0
      %612 = vmatpush1.msra.mxu0 0.0
      %613 = vmatprep.subr.mxu0 0.0
      %614 = vmatpush1.msra.mxu0 0.0
      %615 = vmatprep.subr.mxu0 0.0
      %616 = vmatpush1.msra.mxu0 0.0
      %617 = vmatprep.subr.mxu0 0.0
      %618 = vmatpush1.msra.mxu0 0.0
      %619 = vmatprep.subr.mxu0 0.0
      %620 = vmatpush1.msra.mxu0 0.0
      %621 = vmatprep.subr.mxu0 0.0
      %622 = vmatpush1.msra.mxu0 0.0
      %623 = vmatprep.subr.mxu0 0.0
      %624 = vmatpush1.msra.mxu0 0.0
      %625 = vmatprep.subr.mxu0 0.0
      %626 = vmatpush1.msra.mxu0 0.0
      %627 = vmatprep.subr.mxu0 0.0
      %628 = vmatpush1.msra.mxu0 0.0
      %629 = vmatprep.subr.mxu0 0.0
      %630 = vmatpush1.msra.mxu0 0.0
      %631 = vmatprep.subr.mxu0 0.0
      %632 = vmatpush1.msra.mxu0 0.0
      %633 = vmatprep.subr.mxu0 0.0
      %634 = vmatpush1.msra.mxu0 0.0
      %635 = vmatprep.subr.mxu0 0.0
      %636 = vmatpush1.msra.mxu0 0.0
      %637 = vmatprep.subr.mxu0 0.0
      %638 = vmatpush1.msra.mxu0 0.0
      %639 = vmatprep.subr.mxu0 0.0
      %640 = vmatpush1.msra.mxu0 0.0
      %641 = vmatprep.subr.mxu0 0.0
      %642 = vmatpush1.msra.mxu0 0.0
      %643 = vmatprep.subr.mxu0 0.0
      %644 = vmatpush1.msra.mxu0 0.0
      %645 = vmatprep.subr.mxu0 0.0
      %646 = vmatpush1.msra.mxu0 0.0
      %647 = vmatprep.subr.mxu0 0.0
      %648 = vmatpush1.msra.mxu0 0.0
      %649 = vmatprep.subr.mxu0 0.0
      %650 = vmatpush1.msra.mxu0 0.0
      %651 = vmatprep.subr.mxu0 0.0
      %652 = vmatpush1.msra.mxu0 0.0
      %653 = vmatprep.mubr.f32.mxu0 0.0
      %654 = vmatmul.mubr.f32.gmra.mrb[0].mxu0 %v584
      %v655 = vpop.f32.mrb[0].mxu0
      %v656 = vadd.f32 0.0, %v655
      %v657 = vpop.f32.mrb[0].mxu0
      %658 = vmatprep.mubr.f32.mxu0 0.0
      %659 = vmatmul.mubr.f32.gmra.mrb[0].mxu0 %v587
      %v660 = vpop.f32.mrb[0].mxu0
      %v661 = vadd.f32 0.0, %v660
      %v662 = vpop.f32.mrb[0].mxu0
      %663 = vdwg.mxu0
      %v664 = vadd.f32 %v577, %v656
      %v665 = vadd.f32 %v578, %v661
      %v666 = vld [vmem:[%s5] sm:$0x1]
      %v668 = vlaneseq
      %v669 = vshrl.u32 %v668, 7
      %v670 = vsub.s32 0, %v669
      %v671 = vrot.slane %v666, %v670
      %v673 = vadd.f32 %v664, %v671
      %v674 = vadd.f32 %v665, %v671
      %675 = vst [vmem:[%s319] sm:$0xff] %v673
      %676 = vst [vmem:[%s319 + $0x8] sm:$0xff] %v674
      %s677 = smul.u32 2, %s17
      %p678 = scmp.lt.s32.totalorder %s677, 15
      %s679 = scalar_select %p678, %s677, 15
      %s680 = smul.addr %s679, 8
      %s681 = scalar_lea.vmem %s6, %s680
      // Predicated region
      $region45: #{fourier_cross_attention.2} parent=43 // pred_check
        %p682 = pneg %p181
      $region46: #{fourier_cross_attention.2} parent=43 // pred_check_branch
        %684 = sbr.rel (%p682) target = $region48
      $region47: #{fourier_cross_attention.2} parent=43 // pred_region
        %s685 = smul.u32 2, %s17
      $region48: #{fourier_cross_attention.2} parent=43 // pred_fallthru
        _
    $region44: #{fourier_cross_attention.2} parent=5 // pred_fallthru
      _
    %p686 = scmp.le.s32.totalorder 2, %s12
    // Predicated region
    $region49: #{fourier_cross_attention.2} parent=5 // pred_check
      %p687 = pneg %p686
    $region50: #{fourier_cross_attention.2} parent=5 // pred_check_branch
      %689 = sbr.rel (%p687) target = $region52
    $region51: #{fourier_cross_attention.2} parent=5 // pred_region
      %s690 = ssub.s32 %s12, 2
      // Predicated region
      $region53: #{fourier_cross_attention.2} parent=51 // pred_check
        %p691 = pneg %p187
      $region54: #{fourier_cross_attention.2} parent=51 // pred_check_branch
        %693 = sbr.rel (%p691) target = $region56
      $region55: #{fourier_cross_attention.2} parent=51 // pred_region
        %s694 = smul.u32 2, %s18
        %p695 = scmp.lt.s32.totalorder %s694, 15
        %s696 = scalar_select %p695, %s694, 15
        %s697 = smul.addr %s696, 8
        %s698 = scalar_lea.vmem %s6, %s697
      $region56: #{fourier_cross_attention.2} parent=51 // pred_fallthru
        _
    $region52: #{fourier_cross_attention.2} parent=5 // pred_fallthru
      _
  $region6: #{fourier_cross_attention.2} parent=0 // loop_footer
    %s16 = sadd.s32 1, %s12
  $region7: #{fourier_cross_attention.2} parent=0 // loop_footer_branch
    %11 = sbr.rel target = $region3
  $region8: #{fourier_cross_attention.2} parent=0 // loop_exit
    _

// kernel: fourier_cross_attention.3
$region0: #{fourier_cross_attention.3}
  #allocation0 [shape = 'u32[]', space=smem, size = 0x4, offset = 0x4, fixed_abs, tag = 'smem constant byte address 0x4 - core index']
  #allocation1 [shape = 'u32[144,128]{1,0:T(1,128)}', space=vmem, size = 0x12000, scoped, tag = 'internal scratch']
  %s0 = inlined_call_operand.vmem [shape: f32[2,256,8], index: 0, kind: input, shape index: {}]
  %s1 = inlined_call_operand.vmem [shape: f32[2,256,8], index: 1, kind: input, shape index: {}]
  %s2 = inlined_call_operand.vmem [shape: f32[2,256,8], index: 2, kind: input, shape index: {}]
  %s3 = inlined_call_operand.vmem [shape: f32[2,8,256], index: 3, kind: output, shape index: {}]
  %s4 = sld [smem:[#allocation0]]
  $region45: #{fourier_cross_attention.3} parent=0
    _
  %s6 = ssub.s32 1, %s4
  %s7 = scalar_select 0, %s6, %s4
  loop: start=0, step=1, limit=6
  $region2: #{fourier_cross_attention.3} parent=0 // loop_pre_header
    _
  $region3: #{fourier_cross_attention.3} parent=0 // loop_header
    %s9 = sphi 0, %s13
    %p10 = scmp.ge.s32.totalorder %s9, 6
    %s16 = sphi 0, %s28
    %s17 = sphi 0, %s24
    %s18 = sphi 0, %s16
    %s19 = sphi 0, %s17
    %s20 = sphi 0, %s18
    %s21 = sphi 0, %s19
    %s33 = sphi 0, %s35
    %s36 = sphi 0, %s33
    %s37 = sphi 0, %s36
    %s53 = sphi 0, %s37
    %s59 = sphi 0, %s61
    %s62 = sphi 0, %s59
    %s63 = sphi 0, %s62
    %s79 = sphi 0, %s63
    %s85 = sphi 0, %s87
    %s88 = sphi 0, %s85
    %s89 = sphi 0, %s88
    %s105 = sphi 0, %s89
    %s113 = sphi 0, %s115
    %s116 = sphi 0, %s113
    %s117 = sphi 0, %s116
    %s133 = sphi 0, %s117
  $region4: #{fourier_cross_attention.3} parent=0 // loop_header_branch
    %12 = sbr.rel (%p10) target = $region8
  $region5: #{fourier_cross_attention.3} parent=0 // loop_body
    %s14 = ssub.s32 %s9, 1
    %s15 = ssub.s32 %s9, 2
    %s22 = sadd.s32 1, %s17
    %p23 = scmp.ge.s32.totalorder %s22, 2
    %s24 = scalar_select %p23, 0, %s22
    %s25 = sadd.s32 1, %s16
    %s26 = scalar_select %p23, %s25, %s16
    %p27 = scmp.ge.s32.totalorder %s26, 2
    %s28 = scalar_select %p27, 0, %s26
    %s29 = ssub.s32 %s16, %s28
    %s30 = ssub.s32 %s17, %s24
    %s31 = sor.u32 %s29, %s30
    %p32 = scmp.eq.s32.totalorder %s31, 0
    %s34 = sadd.s32 %s33, 1
    %s35 = scalar_select %p32, %s33, %s34
    %p38 = pneg %p32
    %p39 = scmp.eq.s32.totalorder %s9, 3
    %p40 = por %p38, %p39
    %p41 = scmp.ne.s32.totalorder %s33, %s36
    %p42 = scmp.eq.s32.totalorder %s9, 0
    %p43 = por %p41, %p42
    %p44 = scmp.ne.s32.totalorder %s33, %s36
    %p45 = scmp.eq.s32.totalorder %s14, 3
    %p46 = por %p44, %p45
    %p47 = scmp.ne.s32.totalorder %s36, %s37
    %p48 = scmp.eq.s32.totalorder %s14, 0
    %p49 = por %p47, %p48
    %p50 = scmp.ne.s32.totalorder %s36, %s37
    %p51 = scmp.eq.s32.totalorder %s15, 3
    %p52 = por %p50, %p51
    %p54 = scmp.ne.s32.totalorder %s37, %s53
    %p55 = scmp.eq.s32.totalorder %s15, 0
    %p56 = por %p54, %p55
    %s57 = ssub.s32 %s16, %s28
    %p58 = scmp.eq.s32.totalorder %s57, 0
    %s60 = sadd.s32 %s59, 1
    %s61 = scalar_select %p58, %s59, %s60
    %p64 = pneg %p58
    %p65 = scmp.eq.s32.totalorder %s9, 3
    %p66 = por %p64, %p65
    %p67 = scmp.ne.s32.totalorder %s59, %s62
    %p68 = scmp.eq.s32.totalorder %s9, 0
    %p69 = por %p67, %p68
    %p70 = scmp.ne.s32.totalorder %s59, %s62
    %p71 = scmp.eq.s32.totalorder %s14, 3
    %p72 = por %p70, %p71
    %p73 = scmp.ne.s32.totalorder %s62, %s63
    %p74 = scmp.eq.s32.totalorder %s14, 0
    %p75 = por %p73, %p74
    %p76 = scmp.ne.s32.totalorder %s62, %s63
    %p77 = scmp.eq.s32.totalorder %s15, 3
    %p78 = por %p76, %p77
    %p80 = scmp.ne.s32.totalorder %s63, %s79
    %p81 = scmp.eq.s32.totalorder %s15, 0
    %p82 = por %p80, %p81
    %s83 = ssub.s32 %s16, %s28
    %p84 = scmp.eq.s32.totalorder %s83, 0
    %s86 = sadd.s32 %s85, 1
    %s87 = scalar_select %p84, %s85, %s86
    %p90 = pneg %p84
    %p91 = scmp.eq.s32.totalorder %s9, 3
    %p92 = por %p90, %p91
    %p93 = scmp.ne.s32.totalorder %s85, %s88
    %p94 = scmp.eq.s32.totalorder %s9, 0
    %p95 = por %p93, %p94
    %p96 = scmp.ne.s32.totalorder %s85, %s88
    %p97 = scmp.eq.s32.totalorder %s14, 3
    %p98 = por %p96, %p97
    %p99 = scmp.ne.s32.totalorder %s88, %s89
    %p100 = scmp.eq.s32.totalorder %s14, 0
    %p101 = por %p99, %p100
    %p102 = scmp.ne.s32.totalorder %s88, %s89
    %p103 = scmp.eq.s32.totalorder %s15, 3
    %p104 = por %p102, %p103
    %p106 = scmp.ne.s32.totalorder %s89, %s105
    %p107 = scmp.eq.s32.totalorder %s15, 0
    %p108 = por %p106, %p107
    %s109 = ssub.s32 %s16, %s28
    %s110 = ssub.s32 %s17, %s24
    %s111 = sor.u32 %s109, %s110
    %p112 = scmp.eq.s32.totalorder %s111, 0
    %s114 = sadd.s32 %s113, 1
    %s115 = scalar_select %p112, %s113, %s114
    %p118 = pneg %p112
    %p119 = scmp.eq.s32.totalorder %s9, 3
    %p120 = por %p118, %p119
    %p121 = scmp.ne.s32.totalorder %s113, %s116
    %p122 = scmp.eq.s32.totalorder %s9, 0
    %p123 = por %p121, %p122
    %p124 = scmp.ne.s32.totalorder %s113, %s116
    %p125 = scmp.eq.s32.totalorder %s14, 3
    %p126 = por %p124, %p125
    %p127 = scmp.ne.s32.totalorder %s116, %s117
    %p128 = scmp.eq.s32.totalorder %s14, 0
    %p129 = por %p127, %p128
    %p130 = scmp.ne.s32.totalorder %s116, %s117
    %p131 = scmp.eq.s32.totalorder %s15, 3
    %p132 = por %p130, %p131
    %p134 = scmp.ne.s32.totalorder %s117, %s133
    %p135 = scmp.eq.s32.totalorder %s15, 0
    %p136 = por %p134, %p135
    %p137 = scmp.le.s32.totalorder 1, %s9
    %p138 = scmp.lt.s32.totalorder %s9, 5
    %p139 = pnand %p137, %p138
    %p140 = pneg %p139
    // Predicated region
    $region9: #{fourier_cross_attention.3} parent=5 // pred_check
      _
    $region10: #{fourier_cross_attention.3} parent=5 // pred_check_branch
      %142 = sbr.rel (%p139) target = $region12
    $region11: #{fourier_cross_attention.3} parent=5 // pred_region
      %s143 = ssub.s32 %s9, 1
    $region12: #{fourier_cross_attention.3} parent=5 // pred_fallthru
      _
    %p144 = scmp.lt.s32.totalorder %s9, 4
    // Predicated region
    $region13: #{fourier_cross_attention.3} parent=5 // pred_check
      %p145 = pneg %p144
    $region14: #{fourier_cross_attention.3} parent=5 // pred_check_branch
      %147 = sbr.rel (%p145) target = $region16
    $region15: #{fourier_cross_attention.3} parent=5 // pred_region
      // Predicated region
      $region17: #{fourier_cross_attention.3} parent=15 // pred_check
        %p148 = pneg %p43
      $region18: #{fourier_cross_attention.3} parent=15 // pred_check_branch
        %150 = sbr.rel (%p148) target = $region20
      $region19: #{fourier_cross_attention.3} parent=15 // pred_region
        %s151 = smul.u32 16, %s17
        %p152 = scmp.lt.s32.totalorder %s16, 1
        %s153 = scalar_select %p152, %s16, 1
        %p154 = scmp.lt.s32.totalorder %s151, 31
        %s155 = scalar_select %p154, %s151, 31
        %s156 = smul.addr %s153, 32
        %s157 = sadd.s32 %s155, %s156
        %s158 = smul.addr %s157, 8
        %s159 = scalar_lea.vmem %s0, %s158
        %s160 = smul.u32 16, %s17
      $region20: #{fourier_cross_attention.3} parent=15 // pred_fallthru
        _
      // Predicated region
      $region21: #{fourier_cross_attention.3} parent=15 // pred_check
        %p161 = pneg %p69
      $region22: #{fourier_cross_attention.3} parent=15 // pred_check_branch
        %163 = sbr.rel (%p161) target = $region24
      $region23: #{fourier_cross_attention.3} parent=15 // pred_region
        %p164 = scmp.lt.s32.totalorder %s16, 1
        %s165 = scalar_select %p164, %s16, 1
        %s166 = smul.addr %s165, 32
        %s167 = smul.addr %s166, 8
        %s168 = scalar_lea.vmem %s1, %s167
      $region24: #{fourier_cross_attention.3} parent=15 // pred_fallthru
        _
      // Predicated region
      $region25: #{fourier_cross_attention.3} parent=15 // pred_check
        %p169 = pneg %p95
      $region26: #{fourier_cross_attention.3} parent=15 // pred_check_branch
        %171 = sbr.rel (%p169) target = $region28
      $region27: #{fourier_cross_attention.3} parent=15 // pred_region
        %p172 = scmp.lt.s32.totalorder %s16, 1
        %s173 = scalar_select %p172, %s16, 1
        %s174 = smul.addr %s173, 32
        %s175 = smul.addr %s174, 8
        %s176 = scalar_lea.vmem %s2, %s175
      $region28: #{fourier_cross_attention.3} parent=15 // pred_fallthru
        _
    $region16: #{fourier_cross_attention.3} parent=5 // pred_fallthru
      _
    %p177 = scmp.le.s32.totalorder 1, %s9
    %p178 = scmp.lt.s32.totalorder %s9, 5
    %p179 = pnand %p177, %p178
    %p180 = pneg %p179
    // Predicated region
    $region29: #{fourier_cross_attention.3} parent=5 // pred_check
      _
    $region30: #{fourier_cross_attention.3} parent=5 // pred_check_branch
      %182 = sbr.rel (%p179) target = $region32
    $region31: #{fourier_cross_attention.3} parent=5 // pred_region
      %s183 = ssub.s32 %s9, 1
      %s184 = smul.u32 16, %s19
      %p185 = scmp.lt.s32.totalorder %s18, 1
      %s186 = scalar_select %p185, %s18, 1
      %p187 = scmp.lt.s32.totalorder %s184, 31
      %s188 = scalar_select %p187, %s184, 31
      %s189 = smul.addr %s186, 32
      %s190 = sadd.s32 %s188, %s189
      %s191 = smul.addr %s190, 8
      %s192 = scalar_lea.vmem %s0, %s191
      %p193 = pneg %p49
      %p194 = pneg %p46
      %p195 = scmp.lt.s32.totalorder %s18, 1
      %s196 = scalar_select %p195, %s18, 1
      %s197 = smul.addr %s196, 32
      %s198 = smul.addr %s197, 8
      %s199 = scalar_lea.vmem %s1, %s198
      %p200 = pneg %p75
      %p201 = pneg %p72
      %p202 = scmp.lt.s32.totalorder %s18, 1
      %s203 = scalar_select %p202, %s18, 1
      %s204 = smul.addr %s203, 32
      %s205 = smul.addr %s204, 8
      %s206 = scalar_lea.vmem %s2, %s205
      %p207 = pneg %p101
      %p208 = pneg %p98
      %p209 = pneg %p129
      %p210 = pneg %p126
      %p211 = scmp.lt.s32.totalorder %s18, 1
      %s212 = scalar_select %p211, %s18, 1
      %p213 = scmp.lt.s32.totalorder %s19, 1
      %s214 = scalar_select %p213, %s19, 1
      %s215 = smul.addr %s212, 2
      %s216 = sadd.s32 %s214, %s215
      %s217 = smul.addr %s216, 8
      %s218 = scalar_lea.vmem %s3, %s217
      %s219 = smul.u32 16, %s19
      %p220 = scmp.lt.s32.totalorder %s18, 1
      %s221 = scalar_select %p220, %s18, 1
      %p222 = scmp.lt.s32.totalorder %s219, 31
      %s223 = scalar_select %p222, %s219, 31
      %s224 = smul.addr %s221, 32
      %s225 = sadd.s32 %s223, %s224
      %s226 = smul.addr %s225, 8
      %s227 = scalar_lea.vmem %s0, %s226
      %s228 = smul.u32 16, %s19
      %p229 = scmp.lt.s32.totalorder %s18, 1
      %s230 = scalar_select %p229, %s18, 1
      %s231 = smul.addr %s230, 32
      %s232 = smul.addr %s231, 8
      %s233 = scalar_lea.vmem %s1, %s232
      %p234 = scmp.lt.s32.totalorder %s18, 1
      %s235 = scalar_select %p234, %s18, 1
      %s236 = smul.addr %s235, 32
      %s237 = smul.addr %s236, 8
      %s238 = scalar_lea.vmem %s2, %s237
      %p239 = scmp.lt.s32.totalorder %s18, 1
      %s240 = scalar_select %p239, %s18, 1
      %p241 = scmp.lt.s32.totalorder %s19, 1
      %s242 = scalar_select %p241, %s19, 1
      %s243 = smul.addr %s240, 2
      %s244 = sadd.s32 %s242, %s243
      %s245 = smul.addr %s244, 8
      %s246 = scalar_lea.vmem %s3, %s245
      %v247 = vld [vmem:[%s227] sm:$0xff]
      %v248 = vld [vmem:[%s227 + $0x8] sm:$0xff]
      %v249 = vld [vmem:[%s227 + $0x10] sm:$0xff]
      %v250 = vld [vmem:[%s227 + $0x18] sm:$0xff]
      %v251 = vld [vmem:[%s227 + $0x20] sm:$0xff]
      %v252 = vld [vmem:[%s227 + $0x28] sm:$0xff]
      %v253 = vld [vmem:[%s227 + $0x30] sm:$0xff]
      %v254 = vld [vmem:[%s227 + $0x38] sm:$0xff]
      %v255 = vld [vmem:[%s227 + $0x40] sm:$0xff]
      %v256 = vld [vmem:[%s227 + $0x48] sm:$0xff]
      %v257 = vld [vmem:[%s227 + $0x50] sm:$0xff]
      %v258 = vld [vmem:[%s227 + $0x58] sm:$0xff]
      %v259 = vld [vmem:[%s227 + $0x60] sm:$0xff]
      %v260 = vld [vmem:[%s227 + $0x68] sm:$0xff]
      %v261 = vld [vmem:[%s227 + $0x70] sm:$0xff]
      %v262 = vld [vmem:[%s227 + $0x78] sm:$0xff]
      %v263 = vld [vmem:[%s233] sm:$0xff]
      %v264 = vld [vmem:[%s233 + $0x8] sm:$0xff]
      %v265 = vld [vmem:[%s233 + $0x10] sm:$0xff]
      %v266 = vld [vmem:[%s233 + $0x18] sm:$0xff]
      %v267 = vld [vmem:[%s233 + $0x20] sm:$0xff]
      %v268 = vld [vmem:[%s233 + $0x28] sm:$0xff]
      %v269 = vld [vmem:[%s233 + $0x30] sm:$0xff]
      %v270 = vld [vmem:[%s233 + $0x38] sm:$0xff]
      %v271 = vld [vmem:[%s233 + $0x40] sm:$0xff]
      %v272 = vld [vmem:[%s233 + $0x48] sm:$0xff]
      %v273 = vld [vmem:[%s233 + $0x50] sm:$0xff]
      %v274 = vld [vmem:[%s233 + $0x58] sm:$0xff]
      %v275 = vld [vmem:[%s233 + $0x60] sm:$0xff]
      %v276 = vld [vmem:[%s233 + $0x68] sm:$0xff]
      %v277 = vld [vmem:[%s233 + $0x70] sm:$0xff]
      %v278 = vld [vmem:[%s233 + $0x78] sm:$0xff]
      %v279 = vld [vmem:[%s233 + $0x80] sm:$0xff]
      %v280 = vld [vmem:[%s233 + $0x88] sm:$0xff]
      %v281 = vld [vmem:[%s233 + $0x90] sm:$0xff]
      %v282 = vld [vmem:[%s233 + $0x98] sm:$0xff]
      %v283 = vld [vmem:[%s233 + $0xa0] sm:$0xff]
      %v284 = vld [vmem:[%s233 + $0xa8] sm:$0xff]
      %v285 = vld [vmem:[%s233 + $0xb0] sm:$0xff]
      %v286 = vld [vmem:[%s233 + $0xb8] sm:$0xff]
      %v287 = vld [vmem:[%s233 + $0xc0] sm:$0xff]
      %v288 = vld [vmem:[%s233 + $0xc8] sm:$0xff]
      %v289 = vld [vmem:[%s233 + $0xd0] sm:$0xff]
      %v290 = vld [vmem:[%s233 + $0xd8] sm:$0xff]
      %v291 = vld [vmem:[%s233 + $0xe0] sm:$0xff]
      %v292 = vld [vmem:[%s233 + $0xe8] sm:$0xff]
      %v293 = vld [vmem:[%s233 + $0xf0] sm:$0xff]
      %v294 = vld [vmem:[%s233 + $0xf8] sm:$0xff]
      %v295 = vld [vmem:[%s238] sm:$0xff]
      %v296 = vld [vmem:[%s238 + $0x8] sm:$0xff]
      %v297 = vld [vmem:[%s238 + $0x10] sm:$0xff]
      %v298 = vld [vmem:[%s238 + $0x18] sm:$0xff]
      %v299 = vld [vmem:[%s238 + $0x20] sm:$0xff]
      %v300 = vld [vmem:[%s238 + $0x28] sm:$0xff]
      %v301 = vld [vmem:[%s238 + $0x30] sm:$0xff]
      %v302 = vld [vmem:[%s238 + $0x38] sm:$0xff]
      %v303 = vld [vmem:[%s238 + $0x40] sm:$0xff]
      %v304 = vld [vmem:[%s238 + $0x48] sm:$0xff]
      %v305 = vld [vmem:[%s238 + $0x50] sm:$0xff]
      %v306 = vld [vmem:[%s238 + $0x58] sm:$0xff]
      %v307 = vld [vmem:[%s238 + $0x60] sm:$0xff]
      %v308 = vld [vmem:[%s238 + $0x68] sm:$0xff]
      %v309 = vld [vmem:[%s238 + $0x70] sm:$0xff]
      %v310 = vld [vmem:[%s238 + $0x78] sm:$0xff]
      %v311 = vld [vmem:[%s238 + $0x80] sm:$0xff]
      %v312 = vld [vmem:[%s238 + $0x88] sm:$0xff]
      %v313 = vld [vmem:[%s238 + $0x90] sm:$0xff]
      %v314 = vld [vmem:[%s238 + $0x98] sm:$0xff]
      %v315 = vld [vmem:[%s238 + $0xa0] sm:$0xff]
      %v316 = vld [vmem:[%s238 + $0xa8] sm:$0xff]
      %v317 = vld [vmem:[%s238 + $0xb0] sm:$0xff]
      %v318 = vld [vmem:[%s238 + $0xb8] sm:$0xff]
      %v319 = vld [vmem:[%s238 + $0xc0] sm:$0xff]
      %v320 = vld [vmem:[%s238 + $0xc8] sm:$0xff]
      %v321 = vld [vmem:[%s238 + $0xd0] sm:$0xff]
      %v322 = vld [vmem:[%s238 + $0xd8] sm:$0xff]
      %v323 = vld [vmem:[%s238 + $0xe0] sm:$0xff]
      %v324 = vld [vmem:[%s238 + $0xe8] sm:$0xff]
      %v325 = vld [vmem:[%s238 + $0xf0] sm:$0xff]
      %v326 = vld [vmem:[%s238 + $0xf8] sm:$0xff]
      %v327 = vsub.f32 0.0, %v247
      %v328 = vsub.f32 0.0, %v248
      %v329 = vsub.f32 0.0, %v249
      %v330 = vsub.f32 0.0, %v250
      %v331 = vsub.f32 0.0, %v251
      %v332 = vsub.f32 0.0, %v252
      %v333 = vsub.f32 0.0, %v253
      %v334 = vsub.f32 0.0, %v254
      %v335 = vsub.f32 0.0, %v255
      %v336 = vsub.f32 0.0, %v256
      %v337 = vsub.f32 0.0, %v257
      %v338 = vsub.f32 0.0, %v258
      %v339 = vsub.f32 0.0, %v259
      %v340 = vsub.f32 0.0, %v260
      %v341 = vsub.f32 0.0, %v261
      %v342 = vsub.f32 0.0, %v262
      %vm343 = vcmask 31744
      %v344 = vsel %vm343, %v247, %v327
      %v345 = vsel %vm343, %v248, %v328
      %v346 = vsel %vm343, %v249, %v329
      %v347 = vsel %vm343, %v250, %v330
      %v348 = vsel %vm343, %v251, %v331
      %v349 = vsel %vm343, %v252, %v332
      %v350 = vsel %vm343, %v253, %v333
      %v351 = vsel %vm343, %v254, %v334
      %v352 = vsel %vm343, %v255, %v335
      %v353 = vsel %vm343, %v256, %v336
      %v354 = vsel %vm343, %v257, %v337
      %v355 = vsel %vm343, %v258, %v338
      %v356 = vsel %vm343, %v259, %v339
      %v357 = vsel %vm343, %v260, %v340
      %v358 = vsel %vm343, %v261, %v341
      %v359 = vsel %vm343, %v262, %v342
      %376 = vrot.lane.b32.xlu0 %v247, 124
      %v377 = vpop.permute.xlu0 %376
      %378 = vrot.lane.b32.xlu0 %v248, 124
      %v379 = vpop.permute.xlu0 %378
      %380 = vrot.lane.b32.xlu0 %v249, 124
      %v381 = vpop.permute.xlu0 %380
      %382 = vrot.lane.b32.xlu0 %v250, 124
      %v383 = vpop.permute.xlu0 %382
      %384 = vrot.lane.b32.xlu0 %v251, 124
      %v385 = vpop.permute.xlu0 %384
      %386 = vrot.lane.b32.xlu0 %v252, 124
      %v387 = vpop.permute.xlu0 %386
      %388 = vrot.lane.b32.xlu0 %v253, 124
      %v389 = vpop.permute.xlu0 %388
      %390 = vrot.lane.b32.xlu0 %v254, 124
      %v391 = vpop.permute.xlu0 %390
      %392 = vrot.lane.b32.xlu0 %v255, 124
      %v393 = vpop.permute.xlu0 %392
      %394 = vrot.lane.b32.xlu0 %v256, 124
      %v395 = vpop.permute.xlu0 %394
      %396 = vrot.lane.b32.xlu0 %v257, 124
      %v397 = vpop.permute.xlu0 %396
      %398 = vrot.lane.b32.xlu0 %v258, 124
      %v399 = vpop.permute.xlu0 %398
      %400 = vrot.lane.b32.xlu0 %v259, 124
      %v401 = vpop.permute.xlu0 %400
      %402 = vrot.lane.b32.xlu0 %v260, 124
      %v403 = vpop.permute.xlu0 %402
      %404 = vrot.lane.b32.xlu0 %v261, 124
      %v405 = vpop.permute.xlu0 %404
      %406 = vrot.lane.b32.xlu0 %v262, 124
      %v407 = vpop.permute.xlu0 %406
      %424 = vrot.lane.b32.xlu0 %v247, 4
      %v425 = vpop.permute.xlu0 %424
      %426 = vrot.lane.b32.xlu0 %v248, 4
      %v427 = vpop.permute.xlu0 %426
      %428 = vrot.lane.b32.xlu0 %v249, 4
      %v429 = vpop.permute.xlu0 %428
      %430 = vrot.lane.b32.xlu0 %v250, 4
      %v431 = vpop.permute.xlu0 %430
      %432 = vrot.lane.b32.xlu0 %v251, 4
      %v433 = vpop.permute.xlu0 %432
      %434 = vrot.lane.b32.xlu0 %v252, 4
      %v435 = vpop.permute.xlu0 %434
      %436 = vrot.lane.b32.xlu0 %v253, 4
      %v437 = vpop.permute.xlu0 %436
      %438 = vrot.lane.b32.xlu0 %v254, 4
      %v439 = vpop.permute.xlu0 %438
      %440 = vrot.lane.b32.xlu0 %v255, 4
      %v441 = vpop.permute.xlu0 %440
      %442 = vrot.lane.b32.xlu0 %v256, 4
      %v443 = vpop.permute.xlu0 %442
      %444 = vrot.lane.b32.xlu0 %v257, 4
      %v445 = vpop.permute.xlu0 %444
      %446 = vrot.lane.b32.xlu0 %v258, 4
      %v447 = vpop.permute.xlu0 %446
      %448 = vrot.lane.b32.xlu0 %v259, 4
      %v449 = vpop.permute.xlu0 %448
      %450 = vrot.lane.b32.xlu0 %v260, 4
      %v451 = vpop.permute.xlu0 %450
      %452 = vrot.lane.b32.xlu0 %v261, 4
      %v453 = vpop.permute.xlu0 %452
      %454 = vrot.lane.b32.xlu0 %v262, 4
      %v455 = vpop.permute.xlu0 %454
      %v472 = vsel %vm343, %v377, %v425
      %v473 = vsel %vm343, %v379, %v427
      %v474 = vsel %vm343, %v381, %v429
      %v475 = vsel %vm343, %v383, %v431
      %v476 = vsel %vm343, %v385, %v433
      %v477 = vsel %vm343, %v387, %v435
      %v478 = vsel %vm343, %v389, %v437
      %v479 = vsel %vm343, %v391, %v439
      %v480 = vsel %vm343, %v393, %v441
      %v481 = vsel %vm343, %v395, %v443
      %v482 = vsel %vm343, %v397, %v445
      %v483 = vsel %vm343, %v399, %v447
      %v484 = vsel %vm343, %v401, %v449
      %v485 = vsel %vm343, %v403, %v451
      %v486 = vsel %vm343, %v405, %v453
      %v487 = vsel %vm343, %v407, %v455
      %vm488 = vcmask 64512
      %v490 = vsel %vm488, %v344, 0
      %v493 = vsel %vm488, %v345, 0
      %v496 = vsel %vm488, %v346, 0
      %v499 = vsel %vm488, %v347, 0
      %v502 = vsel %vm488, %v348, 0
      %v505 = vsel %vm488, %v349, 0
      %v508 = vsel %vm488, %v350, 0
      %v511 = vsel %vm488, %v351, 0
      %v514 = vsel %vm488, %v352, 0
      %v517 = vsel %vm488, %v353, 0
      %v520 = vsel %vm488, %v354, 0
      %v523 = vsel %vm488, %v355, 0
      %v526 = vsel %vm488, %v356, 0
      %v529 = vsel %vm488, %v357, 0
      %v532 = vsel %vm488, %v358, 0
      %v535 = vsel %vm488, %v359, 0
      %v538 = vsel %vm488, %v263, 0
      %v541 = vsel %vm488, %v264, 0
      %v544 = vsel %vm488, %v265, 0
      %v547 = vsel %vm488, %v266, 0
      %v550 = vsel %vm488, %v267, 0
      %v553 = vsel %vm488, %v268, 0
      %v556 = vsel %vm488, %v269, 0
      %v559 = vsel %vm488, %v270, 0
      %v562 = vsel %vm488, %v271, 0
      %v565 = vsel %vm488, %v272, 0
      %v568 = vsel %vm488, %v273, 0
      %v571 = vsel %vm488, %v274, 0
      %v574 = vsel %vm488, %v275, 0
      %v577 = vsel %vm488, %v276, 0
      %v580 = vsel %vm488, %v277, 0
      %v583 = vsel %vm488, %v278, 0
      %v586 = vsel %vm488, %v279, 0
      %v589 = vsel %vm488, %v280, 0
      %v592 = vsel %vm488, %v281, 0
      %v595 = vsel %vm488, %v282, 0
      %v598 = vsel %vm488, %v283, 0
      %v601 = vsel %vm488, %v284, 0
      %v604 = vsel %vm488, %v285, 0
      %v607 = vsel %vm488, %v286, 0
      %v610 = vsel %vm488, %v287, 0
      %v613 = vsel %vm488, %v288, 0
      %v616 = vsel %vm488, %v289, 0
      %v619 = vsel %vm488, %v290, 0
      %v622 = vsel %vm488, %v291, 0
      %v625 = vsel %vm488, %v292, 0
      %v628 = vsel %vm488, %v293, 0
      %v631 = vsel %vm488, %v294, 0
      %633 = vmatprep.subr.mxu0 0.0
      %634 = vmatpush1.xpose.msra.mxu0 %v538
      %635 = vmatprep.subr.mxu0 0.0
      %636 = vmatpush1.xpose.msra.mxu0 %v541
      %637 = vmatprep.subr.mxu0 0.0
      %638 = vmatpush1.xpose.msra.mxu0 %v544
      %639 = vmatprep.subr.mxu0 0.0
      %640 = vmatpush1.xpose.msra.mxu0 %v547
      %641 = vmatprep.subr.mxu0 0.0
      %642 = vmatpush1.xpose.msra.mxu0 %v550
      %643 = vmatprep.subr.mxu0 0.0
      %644 = vmatpush1.xpose.msra.mxu0 %v553
      %645 = vmatprep.subr.mxu0 0.0
      %646 = vmatpush1.xpose.msra.mxu0 %v556
      %647 = vmatprep.subr.mxu0 0.0
      %648 = vmatpush1.xpose.msra.mxu0 %v559
      %649 = vmatprep.subr.mxu0 0.0
      %650 = vmatpush1.xpose.msra.mxu0 %v562
      %651 = vmatprep.subr.mxu0 0.0
      %652 = vmatpush1.xpose.msra.mxu0 %v565
      %653 = vmatprep.subr.mxu0 0.0
      %654 = vmatpush1.xpose.msra.mxu0 %v568
      %655 = vmatprep.subr.mxu0 0.0
      %656 = vmatpush1.xpose.msra.mxu0 %v571
      %657 = vmatprep.subr.mxu0 0.0
      %658 = vmatpush1.xpose.msra.mxu0 %v574
      %659 = vmatprep.subr.mxu0 0.0
      %660 = vmatpush1.xpose.msra.mxu0 %v577
      %661 = vmatprep.subr.mxu0 0.0
      %662 = vmatpush1.xpose.msra.mxu0 %v580
      %663 = vmatprep.subr.mxu0 0.0
      %664 = vmatpush1.xpose.msra.mxu0 %v583
      %665 = vmatprep.subr.mxu0 0.0
      %666 = vmatpush1.xpose.msra.mxu0 %v586
      %667 = vmatprep.subr.mxu0 0.0
      %668 = vmatpush1.xpose.msra.mxu0 %v589
      %669 = vmatprep.subr.mxu0 0.0
      %670 = vmatpush1.xpose.msra.mxu0 %v592
      %671 = vmatprep.subr.mxu0 0.0
      %672 = vmatpush1.xpose.msra.mxu0 %v595
      %673 = vmatprep.subr.mxu0 0.0
      %674 = vmatpush1.xpose.msra.mxu0 %v598
      %675 = vmatprep.subr.mxu0 0.0
      %676 = vmatpush1.xpose.msra.mxu0 %v601
      %677 = vmatprep.subr.mxu0 0.0
      %678 = vmatpush1.xpose.msra.mxu0 %v604
      %679 = vmatprep.subr.mxu0 0.0
      %680 = vmatpush1.xpose.msra.mxu0 %v607
      %681 = vmatprep.subr.mxu0 0.0
      %682 = vmatpush1.xpose.msra.mxu0 %v610
      %683 = vmatprep.subr.mxu0 0.0
      %684 = vmatpush1.xpose.msra.mxu0 %v613
      %685 = vmatprep.subr.mxu0 0.0
      %686 = vmatpush1.xpose.msra.mxu0 %v616
      %687 = vmatprep.subr.mxu0 0.0
      %688 = vmatpush1.xpose.msra.mxu0 %v619
      %689 = vmatprep.subr.mxu0 0.0
      %690 = vmatpush1.xpose.msra.mxu0 %v622
      %691 = vmatprep.subr.mxu0 0.0
      %692 = vmatpush1.xpose.msra.mxu0 %v625
      %693 = vmatprep.subr.mxu0 0.0
      %694 = vmatpush1.xpose.msra.mxu0 %v628
      %695 = vmatprep.subr.mxu0 0.0
      %696 = vmatpush1.xpose.msra.mxu0 %v631
      %697 = vmatprep.mubr.f32.mxu0 0.0
      %698 = vmatmul.mubr.f32.gmra.mrb[0].mxu0 %v490
      %v699 = vpop.f32.mrb[0].mxu0
      %v700 = vadd.f32 0.0, %v699
      %v701 = vpop.f32.mrb[0].mxu0
      %v702 = vadd.f32 0.0, %v701
      %703 = vmatprep.mubr.f32.mxu0 0.0
      %704 = vmatmul.mubr.f32.gmra.mrb[0].mxu0 %v493
      %v705 = vpop.f32.mrb[0].mxu0
      %v706 = vadd.f32 0.0, %v705
      %v707 = vpop.f32.mrb[0].mxu0
      %v708 = vadd.f32 0.0, %v707
      %709 = vmatprep.mubr.f32.mxu0 0.0
      %710 = vmatmul.mubr.f32.gmra.mrb[0].mxu0 %v496
      %v711 = vpop.f32.mrb[0].mxu0
      %v712 = vadd.f32 0.0, %v711
      %v713 = vpop.f32.mrb[0].mxu0
      %v714 = vadd.f32 0.0, %v713
      %715 = vmatprep.mubr.f32.mxu0 0.0
      %716 = vmatmul.mubr.f32.gmra.mrb[0].mxu0 %v499
      %v717 = vpop.f32.mrb[0].mxu0
      %v718 = vadd.f32 0.0, %v717
      %v719 = vpop.f32.mrb[0].mxu0
      %v720 = vadd.f32 0.0, %v719
      %721 = vmatprep.mubr.f32.mxu0 0.0
      %722 = vmatmul.mubr.f32.gmra.mrb[0].mxu0 %v502
      %v723 = vpop.f32.mrb[0].mxu0
      %v724 = vadd.f32 0.0, %v723
      %v725 = vpop.f32.mrb[0].mxu0
      %v726 = vadd.f32 0.0, %v725
      %727 = vmatprep.mubr.f32.mxu0 0.0
      %728 = vmatmul.mubr.f32.gmra.mrb[0].mxu0 %v505
      %v729 = vpop.f32.mrb[0].mxu0
      %v730 = vadd.f32 0.0, %v729
      %v731 = vpop.f32.mrb[0].mxu0
      %v732 = vadd.f32 0.0, %v731
      %733 = vmatprep.mubr.f32.mxu0 0.0
      %734 = vmatmul.mubr.f32.gmra.mrb[0].mxu0 %v508
      %v735 = vpop.f32.mrb[0].mxu0
      %v736 = vadd.f32 0.0, %v735
      %v737 = vpop.f32.mrb[0].mxu0
      %v738 = vadd.f32 0.0, %v737
      %739 = vmatprep.mubr.f32.mxu0 0.0
      %740 = vmatmul.mubr.f32.gmra.mrb[0].mxu0 %v511
      %v741 = vpop.f32.mrb[0].mxu0
      %v742 = vadd.f32 0.0, %v741
      %v743 = vpop.f32.mrb[0].mxu0
      %v744 = vadd.f32 0.0, %v743
      %745 = vmatprep.mubr.f32.mxu0 0.0
      %746 = vmatmul.mubr.f32.gmra.mrb[0].mxu0 %v514
      %v747 = vpop.f32.mrb[0].mxu0
      %v748 = vadd.f32 0.0, %v747
      %v749 = vpop.f32.mrb[0].mxu0
      %v750 = vadd.f32 0.0, %v749
      %751 = vmatprep.mubr.f32.mxu0 0.0
      %752 = vmatmul.mubr.f32.gmra.mrb[0].mxu0 %v517
      %v753 = vpop.f32.mrb[0].mxu0
      %v754 = vadd.f32 0.0, %v753
      %v755 = vpop.f32.mrb[0].mxu0
      %v756 = vadd.f32 0.0, %v755
      %757 = vmatprep.mubr.f32.mxu0 0.0
      %758 = vmatmul.mubr.f32.gmra.mrb[0].mxu0 %v520
      %v759 = vpop.f32.mrb[0].mxu0
      %v760 = vadd.f32 0.0, %v759
      %v761 = vpop.f32.mrb[0].mxu0
      %v762 = vadd.f32 0.0, %v761
      %763 = vmatprep.mubr.f32.mxu0 0.0
      %764 = vmatmul.mubr.f32.gmra.mrb[0].mxu0 %v523
      %v765 = vpop.f32.mrb[0].mxu0
      %v766 = vadd.f32 0.0, %v765
      %v767 = vpop.f32.mrb[0].mxu0
      %v768 = vadd.f32 0.0, %v767
      %769 = vmatprep.mubr.f32.mxu0 0.0
      %770 = vmatmul.mubr.f32.gmra.mrb[0].mxu0 %v526
      %v771 = vpop.f32.mrb[0].mxu0
      %v772 = vadd.f32 0.0, %v771
      %v773 = vpop.f32.mrb[0].mxu0
      %v774 = vadd.f32 0.0, %v773
      %775 = vmatprep.mubr.f32.mxu0 0.0
      %776 = vmatmul.mubr.f32.gmra.mrb[0].mxu0 %v529
      %v777 = vpop.f32.mrb[0].mxu0
      %v778 = vadd.f32 0.0, %v777
      %v779 = vpop.f32.mrb[0].mxu0
      %v780 = vadd.f32 0.0, %v779
      %781 = vmatprep.mubr.f32.mxu0 0.0
      %782 = vmatmul.mubr.f32.gmra.mrb[0].mxu0 %v532
      %v783 = vpop.f32.mrb[0].mxu0
      %v784 = vadd.f32 0.0, %v783
      %v785 = vpop.f32.mrb[0].mxu0
      %v786 = vadd.f32 0.0, %v785
      %787 = vmatprep.mubr.f32.mxu0 0.0
      %788 = vmatmul.mubr.f32.gmra.mrb[0].mxu0 %v535
      %v789 = vpop.f32.mrb[0].mxu0
      %v790 = vadd.f32 0.0, %v789
      %v791 = vpop.f32.mrb[0].mxu0
      %v792 = vadd.f32 0.0, %v791
      %793 = vdwg.mxu0
      %v795 = vsel %vm488, %v472, 0
      %v798 = vsel %vm488, %v473, 0
      %v801 = vsel %vm488, %v474, 0
      %v804 = vsel %vm488, %v475, 0
      %v807 = vsel %vm488, %v476, 0
      %v810 = vsel %vm488, %v477, 0
      %v813 = vsel %vm488, %v478, 0
      %v816 = vsel %vm488, %v479, 0
      %v819 = vsel %vm488, %v480, 0
      %v822 = vsel %vm488, %v481, 0
      %v825 = vsel %vm488, %v482, 0
      %v828 = vsel %vm488, %v483, 0
      %v831 = vsel %vm488, %v484, 0
      %v834 = vsel %vm488, %v485, 0
      %v837 = vsel %vm488, %v486, 0
      %v840 = vsel %vm488, %v487, 0
      %842 = vmatprep.subr.mxu0 0.0
      %843 = vmatpush1.xpose.msra.mxu0 %v538
      %844 = vmatprep.subr.mxu0 0.0
      %845 = vmatpush1.xpose.msra.mxu0 %v541
      %846 = vmatprep.subr.mxu0 0.0
      %847 = vmatpush1.xpose.msra.mxu0 %v544
      %848 = vmatprep.subr.mxu0 0.0
      %849 = vmatpush1.xpose.msra.mxu0 %v547
      %850 = vmatprep.subr.mxu0 0.0
      %851 = vmatpush1.xpose.msra.mxu0 %v550
      %852 = vmatprep.subr.mxu0 0.0
      %853 = vmatpush1.xpose.msra.mxu0 %v553
      %854 = vmatprep.subr.mxu0 0.0
      %855 = vmatpush1.xpose.msra.mxu0 %v556
      %856 = vmatprep.subr.mxu0 0.0
      %857 = vmatpush1.xpose.msra.mxu0 %v559
      %858 = vmatprep.subr.mxu0 0.0
      %859 = vmatpush1.xpose.msra.mxu0 %v562
      %860 = vmatprep.subr.mxu0 0.0
      %861 = vmatpush1.xpose.msra.mxu0 %v565
      %862 = vmatprep.subr.mxu0 0.0
      %863 = vmatpush1.xpose.msra.mxu0 %v568
      %864 = vmatprep.subr.mxu0 0.0
      %865 = vmatpush1.xpose.msra.mxu0 %v571
      %866 = vmatprep.subr.mxu0 0.0
      %867 = vmatpush1.xpose.msra.mxu0 %v574
      %868 = vmatprep.subr.mxu0 0.0
      %869 = vmatpush1.xpose.msra.mxu0 %v577
      %870 = vmatprep.subr.mxu0 0.0
      %871 = vmatpush1.xpose.msra.mxu0 %v580
      %872 = vmatprep.subr.mxu0 0.0
      %873 = vmatpush1.xpose.msra.mxu0 %v583
      %874 = vmatprep.subr.mxu0 0.0
      %875 = vmatpush1.xpose.msra.mxu0 %v586
      %876 = vmatprep.subr.mxu0 0.0
      %877 = vmatpush1.xpose.msra.mxu0 %v589
      %878 = vmatprep.subr.mxu0 0.0
      %879 = vmatpush1.xpose.msra.mxu0 %v592
      %880 = vmatprep.subr.mxu0 0.0
      %881 = vmatpush1.xpose.msra.mxu0 %v595
      %882 = vmatprep.subr.mxu0 0.0
      %883 = vmatpush1.xpose.msra.mxu0 %v598
      %884 = vmatprep.subr.mxu0 0.0
      %885 = vmatpush1.xpose.msra.mxu0 %v601
      %886 = vmatprep.subr.mxu0 0.0
      %887 = vmatpush1.xpose.msra.mxu0 %v604
      %888 = vmatprep.subr.mxu0 0.0
      %889 = vmatpush1.xpose.msra.mxu0 %v607
      %890 = vmatprep.subr.mxu0 0.0
      %891 = vmatpush1.xpose.msra.mxu0 %v610
      %892 = vmatprep.subr.mxu0 0.0
      %893 = vmatpush1.xpose.msra.mxu0 %v613
      %894 = vmatprep.subr.mxu0 0.0
      %895 = vmatpush1.xpose.msra.mxu0 %v616
      %896 = vmatprep.subr.mxu0 0.0
      %897 = vmatpush1.xpose.msra.mxu0 %v619
      %898 = vmatprep.subr.mxu0 0.0
      %899 = vmatpush1.xpose.msra.mxu0 %v622
      %900 = vmatprep.subr.mxu0 0.0
      %901 = vmatpush1.xpose.msra.mxu0 %v625
      %902 = vmatprep.subr.mxu0 0.0
      %903 = vmatpush1.xpose.msra.mxu0 %v628
      %904 = vmatprep.subr.mxu0 0.0
      %905 = vmatpush1.xpose.msra.mxu0 %v631
      %906 = vmatprep.mubr.f32.mxu0 0.0
      %907 = vmatmul.mubr.f32.gmra.mrb[0].mxu0 %v795
      %v908 = vpop.f32.mrb[0].mxu0
      %v909 = vadd.f32 0.0, %v908
      %v910 = vpop.f32.mrb[0].mxu0
      %v911 = vadd.f32 0.0, %v910
      %912 = vmatprep.mubr.f32.mxu0 0.0
      %913 = vmatmul.mubr.f32.gmra.mrb[0].mxu0 %v798
      %v914 = vpop.f32.mrb[0].mxu0
      %v915 = vadd.f32 0.0, %v914
      %v916 = vpop.f32.mrb[0].mxu0
      %v917 = vadd.f32 0.0, %v916
      %918 = vmatprep.mubr.f32.mxu0 0.0
      %919 = vmatmul.mubr.f32.gmra.mrb[0].mxu0 %v801
      %v920 = vpop.f32.mrb[0].mxu0
      %v921 = vadd.f32 0.0, %v920
      %v922 = vpop.f32.mrb[0].mxu0
      %v923 = vadd.f32 0.0, %v922
      %924 = vmatprep.mubr.f32.mxu0 0.0
      %925 = vmatmul.mubr.f32.gmra.mrb[0].mxu0 %v804
      %v926 = vpop.f32.mrb[0].mxu0
      %v927 = vadd.f32 0.0, %v926
      %v928 = vpop.f32.mrb[0].mxu0
      %v929 = vadd.f32 0.0, %v928
      %930 = vmatprep.mubr.f32.mxu0 0.0
      %931 = vmatmul.mubr.f32.gmra.mrb[0].mxu0 %v807
      %v932 = vpop.f32.mrb[0].mxu0
      %v933 = vadd.f32 0.0, %v932
      %v934 = vpop.f32.mrb[0].mxu0
      %v935 = vadd.f32 0.0, %v934
      %936 = vmatprep.mubr.f32.mxu0 0.0
      %937 = vmatmul.mubr.f32.gmra.mrb[0].mxu0 %v810
      %v938 = vpop.f32.mrb[0].mxu0
      %v939 = vadd.f32 0.0, %v938
      %v940 = vpop.f32.mrb[0].mxu0
      %v941 = vadd.f32 0.0, %v940
      %942 = vmatprep.mubr.f32.mxu0 0.0
      %943 = vmatmul.mubr.f32.gmra.mrb[0].mxu0 %v813
      %v944 = vpop.f32.mrb[0].mxu0
      %v945 = vadd.f32 0.0, %v944
      %v946 = vpop.f32.mrb[0].mxu0
      %v947 = vadd.f32 0.0, %v946
      %948 = vmatprep.mubr.f32.mxu0 0.0
      %949 = vmatmul.mubr.f32.gmra.mrb[0].mxu0 %v816
      %v950 = vpop.f32.mrb[0].mxu0
      %v951 = vadd.f32 0.0, %v950
      %v952 = vpop.f32.mrb[0].mxu0
      %v953 = vadd.f32 0.0, %v952
      %954 = vmatprep.mubr.f32.mxu0 0.0
      %955 = vmatmul.mubr.f32.gmra.mrb[0].mxu0 %v819
      %v956 = vpop.f32.mrb[0].mxu0
      %v957 = vadd.f32 0.0, %v956
      %v958 = vpop.f32.mrb[0].mxu0
      %v959 = vadd.f32 0.0, %v958
      %960 = vmatprep.mubr.f32.mxu0 0.0
      %961 = vmatmul.mubr.f32.gmra.mrb[0].mxu0 %v822
      %v962 = vpop.f32.mrb[0].mxu0
      %v963 = vadd.f32 0.0, %v962
      %v964 = vpop.f32.mrb[0].mxu0
      %v965 = vadd.f32 0.0, %v964
      %966 = vmatprep.mubr.f32.mxu0 0.0
      %967 = vmatmul.mubr.f32.gmra.mrb[0].mxu0 %v825
      %v968 = vpop.f32.mrb[0].mxu0
      %v969 = vadd.f32 0.0, %v968
      %v970 = vpop.f32.mrb[0].mxu0
      %v971 = vadd.f32 0.0, %v970
      %972 = vmatprep.mubr.f32.mxu0 0.0
      %973 = vmatmul.mubr.f32.gmra.mrb[0].mxu0 %v828
      %v974 = vpop.f32.mrb[0].mxu0
      %v975 = vadd.f32 0.0, %v974
      %v976 = vpop.f32.mrb[0].mxu0
      %v977 = vadd.f32 0.0, %v976
      %978 = vmatprep.mubr.f32.mxu0 0.0
      %979 = vmatmul.mubr.f32.gmra.mrb[0].mxu0 %v831
      %v980 = vpop.f32.mrb[0].mxu0
      %v981 = vadd.f32 0.0, %v980
      %v982 = vpop.f32.mrb[0].mxu0
      %v983 = vadd.f32 0.0, %v982
      %984 = vmatprep.mubr.f32.mxu0 0.0
      %985 = vmatmul.mubr.f32.gmra.mrb[0].mxu0 %v834
      %v986 = vpop.f32.mrb[0].mxu0
      %v987 = vadd.f32 0.0, %v986
      %v988 = vpop.f32.mrb[0].mxu0
      %v989 = vadd.f32 0.0, %v988
      %990 = vmatprep.mubr.f32.mxu0 0.0
      %991 = vmatmul.mubr.f32.gmra.mrb[0].mxu0 %v837
      %v992 = vpop.f32.mrb[0].mxu0
      %v993 = vadd.f32 0.0, %v992
      %v994 = vpop.f32.mrb[0].mxu0
      %v995 = vadd.f32 0.0, %v994
      %996 = vmatprep.mubr.f32.mxu0 0.0
      %997 = vmatmul.mubr.f32.gmra.mrb[0].mxu0 %v840
      %v998 = vpop.f32.mrb[0].mxu0
      %v999 = vadd.f32 0.0, %v998
      %v1000 = vpop.f32.mrb[0].mxu0
      %v1001 = vadd.f32 0.0, %v1000
      %1002 = vdwg.mxu0
      %v1003 = vmul.f32 %v700, %v700
      %v1004 = vmul.f32 %v702, %v702
      %v1005 = vmul.f32 %v706, %v706
      %v1006 = vmul.f32 %v708, %v708
      %v1007 = vmul.f32 %v712, %v712
      %v1008 = vmul.f32 %v714, %v714
      %v1009 = vmul.f32 %v718, %v718
      %v1010 = vmul.f32 %v720, %v720
      %v1011 = vmul.f32 %v724, %v724
      %v1012 = vmul.f32 %v726, %v726
      %v1013 = vmul.f32 %v730, %v730
      %v1014 = vmul.f32 %v732, %v732
      %v1015 = vmul.f32 %v736, %v736
      %v1016 = vmul.f32 %v738, %v738
      %v1017 = vmul.f32 %v742, %v742
      %v1018 = vmul.f32 %v744, %v744
      %v1019 = vmul.f32 %v748, %v748
      %v1020 = vmul.f32 %v750, %v750
      %v1021 = vmul.f32 %v754, %v754
      %v1022 = vmul.f32 %v756, %v756
      %v1023 = vmul.f32 %v760, %v760
      %v1024 = vmul.f32 %v762, %v762
      %v1025 = vmul.f32 %v766, %v766
      %v1026 = vmul.f32 %v768, %v768
      %v1027 = vmul.f32 %v772, %v772
      %v1028 = vmul.f32 %v774, %v774
      %v1029 = vmul.f32 %v778, %v778
      %v1030 = vmul.f32 %v780, %v780
      %v1031 = vmul.f32 %v784, %v784
      %v1032 = vmul.f32 %v786, %v786
      %v1033 = vmul.f32 %v790, %v790
      %v1034 = vmul.f32 %v792, %v792
      %v1035 = vmul.f32 %v909, %v909
      %v1036 = vmul.f32 %v911, %v911
      %v1037 = vmul.f32 %v915, %v915
      %v1038 = vmul.f32 %v917, %v917
      %v1039 = vmul.f32 %v921, %v921
      %v1040 = vmul.f32 %v923, %v923
      %v1041 = vmul.f32 %v927, %v927
      %v1042 = vmul.f32 %v929, %v929
      %v1043 = vmul.f32 %v933, %v933
      %v1044 = vmul.f32 %v935, %v935
      %v1045 = vmul.f32 %v939, %v939
      %v1046 = vmul.f32 %v941, %v941
      %v1047 = vmul.f32 %v945, %v945
      %v1048 = vmul.f32 %v947, %v947
      %v1049 = vmul.f32 %v951, %v951
      %v1050 = vmul.f32 %v953, %v953
      %v1051 = vmul.f32 %v957, %v957
      %v1052 = vmul.f32 %v959, %v959
      %v1053 = vmul.f32 %v963, %v963
      %v1054 = vmul.f32 %v965, %v965
      %v1055 = vmul.f32 %v969, %v969
      %v1056 = vmul.f32 %v971, %v971
      %v1057 = vmul.f32 %v975, %v975
      %v1058 = vmul.f32 %v977, %v977
      %v1059 = vmul.f32 %v981, %v981
      %v1060 = vmul.f32 %v983, %v983
      %v1061 = vmul.f32 %v987, %v987
      %v1062 = vmul.f32 %v989, %v989
      %v1063 = vmul.f32 %v993, %v993
      %v1064 = vmul.f32 %v995, %v995
      %v1065 = vmul.f32 %v999, %v999
      %v1066 = vmul.f32 %v1001, %v1001
      %v1067 = vadd.f32 %v1003, %v1035
      %v1068 = vadd.f32 %v1004, %v1036
      %v1069 = vadd.f32 %v1005, %v1037
      %v1070 = vadd.f32 %v1006, %v1038
      %v1071 = vadd.f32 %v1007, %v1039
      %v1072 = vadd.f32 %v1008, %v1040
      %v1073 = vadd.f32 %v1009, %v1041
      %v1074 = vadd.f32 %v1010, %v1042
      %v1075 = vadd.f32 %v1011, %v1043
      %v1076 = vadd.f32 %v1012, %v1044
      %v1077 = vadd.f32 %v1013, %v1045
      %v1078 = vadd.f32 %v1014, %v1046
      %v1079 = vadd.f32 %v1015, %v1047
      %v1080 = vadd.f32 %v1016, %v1048
      %v1081 = vadd.f32 %v1017, %v1049
      %v1082 = vadd.f32 %v1018, %v1050
      %v1083 = vadd.f32 %v1019, %v1051
      %v1084 = vadd.f32 %v1020, %v1052
      %v1085 = vadd.f32 %v1021, %v1053
      %v1086 = vadd.f32 %v1022, %v1054
      %v1087 = vadd.f32 %v1023, %v1055
      %v1088 = vadd.f32 %v1024, %v1056
      %v1089 = vadd.f32 %v1025, %v1057
      %v1090 = vadd.f32 %v1026, %v1058
      %v1091 = vadd.f32 %v1027, %v1059
      %v1092 = vadd.f32 %v1028, %v1060
      %v1093 = vadd.f32 %v1029, %v1061
      %v1094 = vadd.f32 %v1030, %v1062
      %v1095 = vadd.f32 %v1031, %v1063
      %v1096 = vadd.f32 %v1032, %v1064
      %v1097 = vadd.f32 %v1033, %v1065
      %v1098 = vadd.f32 %v1034, %v1066
      %v1099 = vrsqrt.pop %v1067
      %v1100 = vmul.f32 %v1067, %v1099
      %vm1101 = vcmp.eq.f32.partialorder %v1067, inf
      %v1102 = vsel %vm1101, %v1067, %v1100
      %vm1103 = vcmp.eq.f32.partialorder %v1067, 0.0
      %v1104 = vand.u32 %v1067, 2147483648
      %v1105 = vsel %vm1103, %v1104, %v1102
      %v1106 = vrsqrt.pop %v1068
      %v1107 = vmul.f32 %v1068, %v1106
      %vm1108 = vcmp.eq.f32.partialorder %v1068, inf
      %v1109 = vsel %vm1108, %v1068, %v1107
      %vm1110 = vcmp.eq.f32.partialorder %v1068, 0.0
      %v1111 = vand.u32 %v1068, 2147483648
      %v1112 = vsel %vm1110, %v1111, %v1109
      %v1113 = vrsqrt.pop %v1069
      %v1114 = vmul.f32 %v1069, %v1113
      %vm1115 = vcmp.eq.f32.partialorder %v1069, inf
      %v1116 = vsel %vm1115, %v1069, %v1114
      %vm1117 = vcmp.eq.f32.partialorder %v1069, 0.0
      %v1118 = vand.u32 %v1069, 2147483648
      %v1119 = vsel %vm1117, %v1118, %v1116
      %v1120 = vrsqrt.pop %v1070
      %v1121 = vmul.f32 %v1070, %v1120
      %vm1122 = vcmp.eq.f32.partialorder %v1070, inf
      %v1123 = vsel %vm1122, %v1070, %v1121
      %vm1124 = vcmp.eq.f32.partialorder %v1070, 0.0
      %v1125 = vand.u32 %v1070, 2147483648
      %v1126 = vsel %vm1124, %v1125, %v1123
      %v1127 = vrsqrt.pop %v1071
      %v1128 = vmul.f32 %v1071, %v1127
      %vm1129 = vcmp.eq.f32.partialorder %v1071, inf
      %v1130 = vsel %vm1129, %v1071, %v1128
      %vm1131 = vcmp.eq.f32.partialorder %v1071, 0.0
      %v1132 = vand.u32 %v1071, 2147483648
      %v1133 = vsel %vm1131, %v1132, %v1130
      %v1134 = vrsqrt.pop %v1072
      %v1135 = vmul.f32 %v1072, %v1134
      %vm1136 = vcmp.eq.f32.partialorder %v1072, inf
      %v1137 = vsel %vm1136, %v1072, %v1135
      %vm1138 = vcmp.eq.f32.partialorder %v1072, 0.0
      %v1139 = vand.u32 %v1072, 2147483648
      %v1140 = vsel %vm1138, %v1139, %v1137
      %v1141 = vrsqrt.pop %v1073
      %v1142 = vmul.f32 %v1073, %v1141
      %vm1143 = vcmp.eq.f32.partialorder %v1073, inf
      %v1144 = vsel %vm1143, %v1073, %v1142
      %vm1145 = vcmp.eq.f32.partialorder %v1073, 0.0
      %v1146 = vand.u32 %v1073, 2147483648
      %v1147 = vsel %vm1145, %v1146, %v1144
      %v1148 = vrsqrt.pop %v1074
      %v1149 = vmul.f32 %v1074, %v1148
      %vm1150 = vcmp.eq.f32.partialorder %v1074, inf
      %v1151 = vsel %vm1150, %v1074, %v1149
      %vm1152 = vcmp.eq.f32.partialorder %v1074, 0.0
      %v1153 = vand.u32 %v1074, 2147483648
      %v1154 = vsel %vm1152, %v1153, %v1151
      %v1155 = vrsqrt.pop %v1075
      %v1156 = vmul.f32 %v1075, %v1155
      %vm1157 = vcmp.eq.f32.partialorder %v1075, inf
      %v1158 = vsel %vm1157, %v1075, %v1156
      %vm1159 = vcmp.eq.f32.partialorder %v1075, 0.0
      %v1160 = vand.u32 %v1075, 2147483648
      %v1161 = vsel %vm1159, %v1160, %v1158
      %v1162 = vrsqrt.pop %v1076
      %v1163 = vmul.f32 %v1076, %v1162
      %vm1164 = vcmp.eq.f32.partialorder %v1076, inf
      %v1165 = vsel %vm1164, %v1076, %v1163
      %vm1166 = vcmp.eq.f32.partialorder %v1076, 0.0
      %v1167 = vand.u32 %v1076, 2147483648
      %v1168 = vsel %vm1166, %v1167, %v1165
      %v1169 = vrsqrt.pop %v1077
      %v1170 = vmul.f32 %v1077, %v1169
      %vm1171 = vcmp.eq.f32.partialorder %v1077, inf
      %v1172 = vsel %vm1171, %v1077, %v1170
      %vm1173 = vcmp.eq.f32.partialorder %v1077, 0.0
      %v1174 = vand.u32 %v1077, 2147483648
      %v1175 = vsel %vm1173, %v1174, %v1172
      %v1176 = vrsqrt.pop %v1078
      %v1177 = vmul.f32 %v1078, %v1176
      %vm1178 = vcmp.eq.f32.partialorder %v1078, inf
      %v1179 = vsel %vm1178, %v1078, %v1177
      %vm1180 = vcmp.eq.f32.partialorder %v1078, 0.0
      %v1181 = vand.u32 %v1078, 2147483648
      %v1182 = vsel %vm1180, %v1181, %v1179
      %v1183 = vrsqrt.pop %v1079
      %v1184 = vmul.f32 %v1079, %v1183
      %vm1185 = vcmp.eq.f32.partialorder %v1079, inf
      %v1186 = vsel %vm1185, %v1079, %v1184
      %vm1187 = vcmp.eq.f32.partialorder %v1079, 0.0
      %v1188 = vand.u32 %v1079, 2147483648
      %v1189 = vsel %vm1187, %v1188, %v1186
      %v1190 = vrsqrt.pop %v1080
      %v1191 = vmul.f32 %v1080, %v1190
      %vm1192 = vcmp.eq.f32.partialorder %v1080, inf
      %v1193 = vsel %vm1192, %v1080, %v1191
      %vm1194 = vcmp.eq.f32.partialorder %v1080, 0.0
      %v1195 = vand.u32 %v1080, 2147483648
      %v1196 = vsel %vm1194, %v1195, %v1193
      %v1197 = vrsqrt.pop %v1081
      %v1198 = vmul.f32 %v1081, %v1197
      %vm1199 = vcmp.eq.f32.partialorder %v1081, inf
      %v1200 = vsel %vm1199, %v1081, %v1198
      %vm1201 = vcmp.eq.f32.partialorder %v1081, 0.0
      %v1202 = vand.u32 %v1081, 2147483648
      %v1203 = vsel %vm1201, %v1202, %v1200
      %v1204 = vrsqrt.pop %v1082
      %v1205 = vmul.f32 %v1082, %v1204
      %vm1206 = vcmp.eq.f32.partialorder %v1082, inf
      %v1207 = vsel %vm1206, %v1082, %v1205
      %vm1208 = vcmp.eq.f32.partialorder %v1082, 0.0
      %v1209 = vand.u32 %v1082, 2147483648
      %v1210 = vsel %vm1208, %v1209, %v1207
      %v1211 = vrsqrt.pop %v1083
      %v1212 = vmul.f32 %v1083, %v1211
      %vm1213 = vcmp.eq.f32.partialorder %v1083, inf
      %v1214 = vsel %vm1213, %v1083, %v1212
      %vm1215 = vcmp.eq.f32.partialorder %v1083, 0.0
      %v1216 = vand.u32 %v1083, 2147483648
      %v1217 = vsel %vm1215, %v1216, %v1214
      %v1218 = vrsqrt.pop %v1084
      %v1219 = vmul.f32 %v1084, %v1218
      %vm1220 = vcmp.eq.f32.partialorder %v1084, inf
      %v1221 = vsel %vm1220, %v1084, %v1219
      %vm1222 = vcmp.eq.f32.partialorder %v1084, 0.0
      %v1223 = vand.u32 %v1084, 2147483648
      %v1224 = vsel %vm1222, %v1223, %v1221
      %v1225 = vrsqrt.pop %v1085
      %v1226 = vmul.f32 %v1085, %v1225
      %vm1227 = vcmp.eq.f32.partialorder %v1085, inf
      %v1228 = vsel %vm1227, %v1085, %v1226
      %vm1229 = vcmp.eq.f32.partialorder %v1085, 0.0
      %v1230 = vand.u32 %v1085, 2147483648
      %v1231 = vsel %vm1229, %v1230, %v1228
      %v1232 = vrsqrt.pop %v1086
      %v1233 = vmul.f32 %v1086, %v1232
      %vm1234 = vcmp.eq.f32.partialorder %v1086, inf
      %v1235 = vsel %vm1234, %v1086, %v1233
      %vm1236 = vcmp.eq.f32.partialorder %v1086, 0.0
      %v1237 = vand.u32 %v1086, 2147483648
      %v1238 = vsel %vm1236, %v1237, %v1235
      %v1239 = vrsqrt.pop %v1087
      %v1240 = vmul.f32 %v1087, %v1239
      %vm1241 = vcmp.eq.f32.partialorder %v1087, inf
      %v1242 = vsel %vm1241, %v1087, %v1240
      %vm1243 = vcmp.eq.f32.partialorder %v1087, 0.0
      %v1244 = vand.u32 %v1087, 2147483648
      %v1245 = vsel %vm1243, %v1244, %v1242
      %v1246 = vrsqrt.pop %v1088
      %v1247 = vmul.f32 %v1088, %v1246
      %vm1248 = vcmp.eq.f32.partialorder %v1088, inf
      %v1249 = vsel %vm1248, %v1088, %v1247
      %vm1250 = vcmp.eq.f32.partialorder %v1088, 0.0
      %v1251 = vand.u32 %v1088, 2147483648
      %v1252 = vsel %vm1250, %v1251, %v1249
      %v1253 = vrsqrt.pop %v1089
      %v1254 = vmul.f32 %v1089, %v1253
      %vm1255 = vcmp.eq.f32.partialorder %v1089, inf
      %v1256 = vsel %vm1255, %v1089, %v1254
      %vm1257 = vcmp.eq.f32.partialorder %v1089, 0.0
      %v1258 = vand.u32 %v1089, 2147483648
      %v1259 = vsel %vm1257, %v1258, %v1256
      %v1260 = vrsqrt.pop %v1090
      %v1261 = vmul.f32 %v1090, %v1260
      %vm1262 = vcmp.eq.f32.partialorder %v1090, inf
      %v1263 = vsel %vm1262, %v1090, %v1261
      %vm1264 = vcmp.eq.f32.partialorder %v1090, 0.0
      %v1265 = vand.u32 %v1090, 2147483648
      %v1266 = vsel %vm1264, %v1265, %v1263
      %v1267 = vrsqrt.pop %v1091
      %v1268 = vmul.f32 %v1091, %v1267
      %vm1269 = vcmp.eq.f32.partialorder %v1091, inf
      %v1270 = vsel %vm1269, %v1091, %v1268
      %vm1271 = vcmp.eq.f32.partialorder %v1091, 0.0
      %v1272 = vand.u32 %v1091, 2147483648
      %v1273 = vsel %vm1271, %v1272, %v1270
      %v1274 = vrsqrt.pop %v1092
      %v1275 = vmul.f32 %v1092, %v1274
      %vm1276 = vcmp.eq.f32.partialorder %v1092, inf
      %v1277 = vsel %vm1276, %v1092, %v1275
      %vm1278 = vcmp.eq.f32.partialorder %v1092, 0.0
      %v1279 = vand.u32 %v1092, 2147483648
      %v1280 = vsel %vm1278, %v1279, %v1277
      %v1281 = vrsqrt.pop %v1093
      %v1282 = vmul.f32 %v1093, %v1281
      %vm1283 = vcmp.eq.f32.partialorder %v1093, inf
      %v1284 = vsel %vm1283, %v1093, %v1282
      %vm1285 = vcmp.eq.f32.partialorder %v1093, 0.0
      %v1286 = vand.u32 %v1093, 2147483648
      %v1287 = vsel %vm1285, %v1286, %v1284
      %v1288 = vrsqrt.pop %v1094
      %v1289 = vmul.f32 %v1094, %v1288
      %vm1290 = vcmp.eq.f32.partialorder %v1094, inf
      %v1291 = vsel %vm1290, %v1094, %v1289
      %vm1292 = vcmp.eq.f32.partialorder %v1094, 0.0
      %v1293 = vand.u32 %v1094, 2147483648
      %v1294 = vsel %vm1292, %v1293, %v1291
      %v1295 = vrsqrt.pop %v1095
      %v1296 = vmul.f32 %v1095, %v1295
      %vm1297 = vcmp.eq.f32.partialorder %v1095, inf
      %v1298 = vsel %vm1297, %v1095, %v1296
      %vm1299 = vcmp.eq.f32.partialorder %v1095, 0.0
      %v1300 = vand.u32 %v1095, 2147483648
      %v1301 = vsel %vm1299, %v1300, %v1298
      %v1302 = vrsqrt.pop %v1096
      %v1303 = vmul.f32 %v1096, %v1302
      %vm1304 = vcmp.eq.f32.partialorder %v1096, inf
      %v1305 = vsel %vm1304, %v1096, %v1303
      %vm1306 = vcmp.eq.f32.partialorder %v1096, 0.0
      %v1307 = vand.u32 %v1096, 2147483648
      %v1308 = vsel %vm1306, %v1307, %v1305
      %v1309 = vrsqrt.pop %v1097
      %v1310 = vmul.f32 %v1097, %v1309
      %vm1311 = vcmp.eq.f32.partialorder %v1097, inf
      %v1312 = vsel %vm1311, %v1097, %v1310
      %vm1313 = vcmp.eq.f32.partialorder %v1097, 0.0
      %v1314 = vand.u32 %v1097, 2147483648
      %v1315 = vsel %vm1313, %v1314, %v1312
      %v1316 = vrsqrt.pop %v1098
      %v1317 = vmul.f32 %v1098, %v1316
      %vm1318 = vcmp.eq.f32.partialorder %v1098, inf
      %v1319 = vsel %vm1318, %v1098, %v1317
      %vm1320 = vcmp.eq.f32.partialorder %v1098, 0.0
      %v1321 = vand.u32 %v1098, 2147483648
      %v1322 = vsel %vm1320, %v1321, %v1319
      %v1323 = vmax.f32 %v1105, %v1112
      %1324 = vmax.xlane.f32.xlu0 %v1323
      %v1325 = vpop.xlane.xlu0 %1324
      %v1326 = vmax.f32 %v1119, %v1126
      %1327 = vmax.xlane.f32.xlu0 %v1326
      %v1328 = vpop.xlane.xlu0 %1327
      %v1329 = vmax.f32 %v1133, %v1140
      %1330 = vmax.xlane.f32.xlu0 %v1329
      %v1331 = vpop.xlane.xlu0 %1330
      %v1332 = vmax.f32 %v1147, %v1154
      %1333 = vmax.xlane.f32.xlu0 %v1332
      %v1334 = vpop.xlane.xlu0 %1333
      %v1335 = vmax.f32 %v1161, %v1168
      %1336 = vmax.xlane.f32.xlu0 %v1335
      %v1337 = vpop.xlane.xlu0 %1336
      %v1338 = vmax.f32 %v1175, %v1182
      %1339 = vmax.xlane.f32.xlu0 %v1338
      %v1340 = vpop.xlane.xlu0 %1339
      %v1341 = vmax.f32 %v1189, %v1196
      %1342 = vmax.xlane.f32.xlu0 %v1341
      %v1343 = vpop.xlane.xlu0 %1342
      %v1344 = vmax.f32 %v1203, %v1210
      %1345 = vmax.xlane.f32.xlu0 %v1344
      %v1346 = vpop.xlane.xlu0 %1345
      %v1347 = vmax.f32 %v1217, %v1224
      %1348 = vmax.xlane.f32.xlu0 %v1347
      %v1349 = vpop.xlane.xlu0 %1348
      %v1350 = vmax.f32 %v1231, %v1238
      %1351 = vmax.xlane.f32.xlu0 %v1350
      %v1352 = vpop.xlane.xlu0 %1351
      %v1353 = vmax.f32 %v1245, %v1252
      %1354 = vmax.xlane.f32.xlu0 %v1353
      %v1355 = vpop.xlane.xlu0 %1354
      %v1356 = vmax.f32 %v1259, %v1266
      %1357 = vmax.xlane.f32.xlu0 %v1356
      %v1358 = vpop.xlane.xlu0 %1357
      %v1359 = vmax.f32 %v1273, %v1280
      %1360 = vmax.xlane.f32.xlu0 %v1359
      %v1361 = vpop.xlane.xlu0 %1360
      %v1362 = vmax.f32 %v1287, %v1294
      %1363 = vmax.xlane.f32.xlu0 %v1362
      %v1364 = vpop.xlane.xlu0 %1363
      %v1365 = vmax.f32 %v1301, %v1308
      %1366 = vmax.xlane.f32.xlu0 %v1365
      %v1367 = vpop.xlane.xlu0 %1366
      %v1368 = vmax.f32 %v1315, %v1322
      %1369 = vmax.xlane.f32.xlu0 %v1368
      %v1370 = vpop.xlane.xlu0 %1369
      %v1371 = vsub.f32 %v1105, %v1325
      %v1372 = vsub.f32 %v1112, %v1325
      %v1373 = vsub.f32 %v1119, %v1328
      %v1374 = vsub.f32 %v1126, %v1328
      %v1375 = vsub.f32 %v1133, %v1331
      %v1376 = vsub.f32 %v1140, %v1331
      %v1377 = vsub.f32 %v1147, %v1334
      %v1378 = vsub.f32 %v1154, %v1334
      %v1379 = vsub.f32 %v1161, %v1337
      %v1380 = vsub.f32 %v1168, %v1337
      %v1381 = vsub.f32 %v1175, %v1340
      %v1382 = vsub.f32 %v1182, %v1340
      %v1383 = vsub.f32 %v1189, %v1343
      %v1384 = vsub.f32 %v1196, %v1343
      %v1385 = vsub.f32 %v1203, %v1346
      %v1386 = vsub.f32 %v1210, %v1346
      %v1387 = vsub.f32 %v1217, %v1349
      %v1388 = vsub.f32 %v1224, %v1349
      %v1389 = vsub.f32 %v1231, %v1352
      %v1390 = vsub.f32 %v1238, %v1352
      %v1391 = vsub.f32 %v1245, %v1355
      %v1392 = vsub.f32 %v1252, %v1355
      %v1393 = vsub.f32 %v1259, %v1358
      %v1394 = vsub.f32 %v1266, %v1358
      %v1395 = vsub.f32 %v1273, %v1361
      %v1396 = vsub.f32 %v1280, %v1361
      %v1397 = vsub.f32 %v1287, %v1364
      %v1398 = vsub.f32 %v1294, %v1364
      %v1399 = vsub.f32 %v1301, %v1367
      %v1400 = vsub.f32 %v1308, %v1367
      %v1401 = vsub.f32 %v1315, %v1370
      %v1402 = vsub.f32 %v1322, %v1370
      %v1403 = vmul.f32 %v1371, 1.442695
      %v1404 = vpow.pop %v1403
      %v1405 = vmul.f32 %v1372, 1.442695
      %v1406 = vpow.pop %v1405
      %v1407 = vmul.f32 %v1373, 1.442695
      %v1408 = vpow.pop %v1407
      %v1409 = vmul.f32 %v1374, 1.442695
      %v1410 = vpow.pop %v1409
      %v1411 = vmul.f32 %v1375, 1.442695
      %v1412 = vpow.pop %v1411
      %v1413 = vmul.f32 %v1376, 1.442695
      %v1414 = vpow.pop %v1413
      %v1415 = vmul.f32 %v1377, 1.442695
      %v1416 = vpow.pop %v1415
      %v1417 = vmul.f32 %v1378, 1.442695
      %v1418 = vpow.pop %v1417
      %v1419 = vmul.f32 %v1379, 1.442695
      %v1420 = vpow.pop %v1419
      %v1421 = vmul.f32 %v1380, 1.442695
      %v1422 = vpow.pop %v1421
      %v1423 = vmul.f32 %v1381, 1.442695
      %v1424 = vpow.pop %v1423
      %v1425 = vmul.f32 %v1382, 1.442695
      %v1426 = vpow.pop %v1425
      %v1427 = vmul.f32 %v1383, 1.442695
      %v1428 = vpow.pop %v1427
      %v1429 = vmul.f32 %v1384, 1.442695
      %v1430 = vpow.pop %v1429
      %v1431 = vmul.f32 %v1385, 1.442695
      %v1432 = vpow.pop %v1431
      %v1433 = vmul.f32 %v1386, 1.442695
      %v1434 = vpow.pop %v1433
      %v1435 = vmul.f32 %v1387, 1.442695
      %v1436 = vpow.pop %v1435
      %v1437 = vmul.f32 %v1388, 1.442695
      %v1438 = vpow.pop %v1437
      %v1439 = vmul.f32 %v1389, 1.442695
      %v1440 = vpow.pop %v1439
      %v1441 = vmul.f32 %v1390, 1.442695
      %v1442 = vpow.pop %v1441
      %v1443 = vmul.f32 %v1391, 1.442695
      %v1444 = vpow.pop %v1443
      %v1445 = vmul.f32 %v1392, 1.442695
      %v1446 = vpow.pop %v1445
      %v1447 = vmul.f32 %v1393, 1.442695
      %v1448 = vpow.pop %v1447
      %v1449 = vmul.f32 %v1394, 1.442695
      %v1450 = vpow.pop %v1449
      %v1451 = vmul.f32 %v1395, 1.442695
      %v1452 = vpow.pop %v1451
      %v1453 = vmul.f32 %v1396, 1.442695
      %v1454 = vpow.pop %v1453
      %v1455 = vmul.f32 %v1397, 1.442695
      %v1456 = vpow.pop %v1455
      %v1457 = vmul.f32 %v1398, 1.442695
      %v1458 = vpow.pop %v1457
      %v1459 = vmul.f32 %v1399, 1.442695
      %v1460 = vpow.pop %v1459
      %v1461 = vmul.f32 %v1400, 1.442695
      %v1462 = vpow.pop %v1461
      %v1463 = vmul.f32 %v1401, 1.442695
      %v1464 = vpow.pop %v1463
      %v1465 = vmul.f32 %v1402, 1.442695
      %v1466 = vpow.pop %v1465
      %v1467 = vadd.f32 %v1404, %v1406
      %1468 = vadd.xlane.f32.xlu0 %v1467
      %v1469 = vpop.xlane.xlu0 %1468
      %v1470 = vadd.f32 %v1408, %v1410
      %1471 = vadd.xlane.f32.xlu0 %v1470
      %v1472 = vpop.xlane.xlu0 %1471
      %v1473 = vadd.f32 %v1412, %v1414
      %1474 = vadd.xlane.f32.xlu0 %v1473
      %v1475 = vpop.xlane.xlu0 %1474
      %v1476 = vadd.f32 %v1416, %v1418
      %1477 = vadd.xlane.f32.xlu0 %v1476
      %v1478 = vpop.xlane.xlu0 %1477
      %v1479 = vadd.f32 %v1420, %v1422
      %1480 = vadd.xlane.f32.xlu0 %v1479
      %v1481 = vpop.xlane.xlu0 %1480
      %v1482 = vadd.f32 %v1424, %v1426
      %1483 = vadd.xlane.f32.xlu0 %v1482
      %v1484 = vpop.xlane.xlu0 %1483
      %v1485 = vadd.f32 %v1428, %v1430
      %1486 = vadd.xlane.f32.xlu0 %v1485
      %v1487 = vpop.xlane.xlu0 %1486
      %v1488 = vadd.f32 %v1432, %v1434
      %1489 = vadd.xlane.f32.xlu0 %v1488
      %v1490 = vpop.xlane.xlu0 %1489
      %v1491 = vadd.f32 %v1436, %v1438
      %1492 = vadd.xlane.f32.xlu0 %v1491
      %v1493 = vpop.xlane.xlu0 %1492
      %v1494 = vadd.f32 %v1440, %v1442
      %1495 = vadd.xlane.f32.xlu0 %v1494
      %v1496 = vpop.xlane.xlu0 %1495
      %v1497 = vadd.f32 %v1444, %v1446
      %1498 = vadd.xlane.f32.xlu0 %v1497
      %v1499 = vpop.xlane.xlu0 %1498
      %v1500 = vadd.f32 %v1448, %v1450
      %1501 = vadd.xlane.f32.xlu0 %v1500
      %v1502 = vpop.xlane.xlu0 %1501
      %v1503 = vadd.f32 %v1452, %v1454
      %1504 = vadd.xlane.f32.xlu0 %v1503
      %v1505 = vpop.xlane.xlu0 %1504
      %v1506 = vadd.f32 %v1456, %v1458
      %1507 = vadd.xlane.f32.xlu0 %v1506
      %v1508 = vpop.xlane.xlu0 %1507
      %v1509 = vadd.f32 %v1460, %v1462
      %1510 = vadd.xlane.f32.xlu0 %v1509
      %v1511 = vpop.xlane.xlu0 %1510
      %v1512 = vadd.f32 %v1464, %v1466
      %1513 = vadd.xlane.f32.xlu0 %v1512
      %v1514 = vpop.xlane.xlu0 %1513
      %v1515 = vrcp.pop %v1469
      %v1516 = vmul.f32 %v1404, %v1515
      %v1517 = vmul.f32 %v1406, %v1515
      %v1518 = vrcp.pop %v1472
      %v1519 = vmul.f32 %v1408, %v1518
      %v1520 = vmul.f32 %v1410, %v1518
      %v1521 = vrcp.pop %v1475
      %v1522 = vmul.f32 %v1412, %v1521
      %v1523 = vmul.f32 %v1414, %v1521
      %v1524 = vrcp.pop %v1478
      %v1525 = vmul.f32 %v1416, %v1524
      %v1526 = vmul.f32 %v1418, %v1524
      %v1527 = vrcp.pop %v1481
      %v1528 = vmul.f32 %v1420, %v1527
      %v1529 = vmul.f32 %v1422, %v1527
      %v1530 = vrcp.pop %v1484
      %v1531 = vmul.f32 %v1424, %v1530
      %v1532 = vmul.f32 %v1426, %v1530
      %v1533 = vrcp.pop %v1487
      %v1534 = vmul.f32 %v1428, %v1533
      %v1535 = vmul.f32 %v1430, %v1533
      %v1536 = vrcp.pop %v1490
      %v1537 = vmul.f32 %v1432, %v1536
      %v1538 = vmul.f32 %v1434, %v1536
      %v1539 = vrcp.pop %v1493
      %v1540 = vmul.f32 %v1436, %v1539
      %v1541 = vmul.f32 %v1438, %v1539
      %v1542 = vrcp.pop %v1496
      %v1543 = vmul.f32 %v1440, %v1542
      %v1544 = vmul.f32 %v1442, %v1542
      %v1545 = vrcp.pop %v1499
      %v1546 = vmul.f32 %v1444, %v1545
      %v1547 = vmul.f32 %v1446, %v1545
      %v1548 = vrcp.pop %v1502
      %v1549 = vmul.f32 %v1448, %v1548
      %v1550 = vmul.f32 %v1450, %v1548
      %v1551 = vrcp.pop %v1505
      %v1552 = vmul.f32 %v1452, %v1551
      %v1553 = vmul.f32 %v1454, %v1551
      %v1554 = vrcp.pop %v1508
      %v1555 = vmul.f32 %v1456, %v1554
      %v1556 = vmul.f32 %v1458, %v1554
      %v1557 = vrcp.pop %v1511
      %v1558 = vmul.f32 %v1460, %v1557
      %v1559 = vmul.f32 %v1462, %v1557
      %v1560 = vrcp.pop %v1514
      %v1561 = vmul.f32 %v1464, %v1560
      %v1562 = vmul.f32 %v1466, %v1560
      %1563 = vxpose.xlu0.b32.start [1/16] %v295, 128
      %1564 = vxpose.xlu0.b32.cont [2/16] %v296, 128
      %1565 = vxpose.xlu0.b32.cont [3/16] %v297, 128
      %1566 = vxpose.xlu0.b32.cont [4/16] %v298, 128
      %1567 = vxpose.xlu0.b32.cont [5/16] %v299, 128
      %1568 = vxpose.xlu0.b32.cont [6/16] %v300, 128
      %1569 = vxpose.xlu0.b32.cont [7/16] %v301, 128
      %1570 = vxpose.xlu0.b32.cont [8/16] %v302, 128
      %1571 = vxpose.xlu0.b32.cont [9/16] %v303, 128
      %1572 = vxpose.xlu0.b32.cont [10/16] %v304, 128
      %1573 = vxpose.xlu0.b32.cont [11/16] %v305, 128
      %1574 = vxpose.xlu0.b32.cont [12/16] %v306, 128
      %1575 = vxpose.xlu0.b32.cont [13/16] %v307, 128
      %1576 = vxpose.xlu0.b32.cont [14/16] %v308, 128
      %1577 = vxpose.xlu0.b32.cont [15/16] %v309, 128
      %1578 = vxpose.xlu0.b32.end [16/16] %v310, 128
      %v1579 = vpop.trf.xlu0
      %v1580 = vpop.trf.xlu0
      %v1581 = vpop.trf.xlu0
      %v1582 = vpop.trf.xlu0
      %v1583 = vpop.trf.xlu0
      %v1584 = vpop.trf.xlu0
      %v1585 = vpop.trf.xlu0
      %v1586 = vpop.trf.xlu0
      %v1587 = vpop.trf.xlu0
      %v1588 = vpop.trf.xlu0
      %v1589 = vpop.trf.xlu0
      %v1590 = vpop.trf.xlu0
      %v1591 = vpop.trf.xlu0
      %v1592 = vpop.trf.xlu0
      %v1593 = vpop.trf.xlu0
      %v1594 = vpop.trf.xlu0
      %1595 = vxpose.xlu0.b32.start [1/16] %v311, 128
      %1596 = vxpose.xlu0.b32.cont [2/16] %v312, 128
      %1597 = vxpose.xlu0.b32.cont [3/16] %v313, 128
      %1598 = vxpose.xlu0.b32.cont [4/16] %v314, 128
      %1599 = vxpose.xlu0.b32.cont [5/16] %v315, 128
      %1600 = vxpose.xlu0.b32.cont [6/16] %v316, 128
      %1601 = vxpose.xlu0.b32.cont [7/16] %v317, 128
      %1602 = vxpose.xlu0.b32.cont [8/16] %v318, 128
      %1603 = vxpose.xlu0.b32.cont [9/16] %v319, 128
      %1604 = vxpose.xlu0.b32.cont [10/16] %v320, 128
      %1605 = vxpose.xlu0.b32.cont [11/16] %v321, 128
      %1606 = vxpose.xlu0.b32.cont [12/16] %v322, 128
      %1607 = vxpose.xlu0.b32.cont [13/16] %v323, 128
      %1608 = vxpose.xlu0.b32.cont [14/16] %v324, 128
      %1609 = vxpose.xlu0.b32.cont [15/16] %v325, 128
      %1610 = vxpose.xlu0.b32.end [16/16] %v326, 128
      %v1611 = vpop.trf.xlu0
      %v1612 = vpop.trf.xlu0
      %v1613 = vpop.trf.xlu0
      %v1614 = vpop.trf.xlu0
      %v1615 = vpop.trf.xlu0
      %v1616 = vpop.trf.xlu0
      %v1617 = vpop.trf.xlu0
      %v1618 = vpop.trf.xlu0
      %v1619 = vpop.trf.xlu0
      %v1620 = vpop.trf.xlu0
      %v1621 = vpop.trf.xlu0
      %v1622 = vpop.trf.xlu0
      %v1623 = vpop.trf.xlu0
      %v1624 = vpop.trf.xlu0
      %v1625 = vpop.trf.xlu0
      %v1626 = vpop.trf.xlu0
      %1627 = vmatprep.subr.mxu0 %v1517
      %1628 = vmatpush1.xpose.msra.mxu0 %v1516
      %1629 = vmatprep.subr.mxu0 %v1520
      %1630 = vmatpush1.xpose.msra.mxu0 %v1519
      %1631 = vmatprep.subr.mxu0 %v1523
      %1632 = vmatpush1.xpose.msra.mxu0 %v1522
      %1633 = vmatprep.subr.mxu0 %v1526
      %1634 = vmatpush1.xpose.msra.mxu0 %v1525
      %1635 = vmatprep.subr.mxu0 %v1529
      %1636 = vmatpush1.xpose.msra.mxu0 %v1528
      %1637 = vmatprep.subr.mxu0 %v1532
      %1638 = vmatpush1.xpose.msra.mxu0 %v1531
      %1639 = vmatprep.subr.mxu0 %v1535
      %1640 = vmatpush1.xpose.msra.mxu0 %v1534
      %1641 = vmatprep.subr.mxu0 %v1538
      %1642 = vmatpush1.xpose.msra.mxu0 %v1537
      %1643 = vmatprep.subr.mxu0 %v1541
      %1644 = vmatpush1.xpose.msra.mxu0 %v1540
      %1645 = vmatprep.subr.mxu0 %v1544
      %1646 = vmatpush1.xpose.msra.mxu0 %v1543
      %1647 = vmatprep.subr.mxu0 %v1547
      %1648 = vmatpush1.xpose.msra.mxu0 %v1546
      %1649 = vmatprep.subr.mxu0 %v1550
      %1650 = vmatpush1.xpose.msra.mxu0 %v1549
      %1651 = vmatprep.subr.mxu0 %v1553
      %1652 = vmatpush1.xpose.msra.mxu0 %v1552
      %1653 = vmatprep.subr.mxu0 %v1556
      %1654 = vmatpush1.xpose.msra.mxu0 %v1555
      %1655 = vmatprep.subr.mxu0 %v1559
      %1656 = vmatpush1.xpose.msra.mxu0 %v1558
      %1657 = vmatprep.subr.mxu0 %v1562
      %1658 = vmatpush1.xpose.msra.mxu0 %v1561
      %1659 = vmatprep.subr.mxu0 0.0
      %1660 = vmatpush1.xpose.msra.mxu0 0.0
      %1661 = vmatprep.subr.mxu0 0.0
      %1662 = vmatpush1.xpose.msra.mxu0 0.0
      %1663 = vmatprep.subr.mxu0 0.0
      %1664 = vmatpush1.xpose.msra.mxu0 0.0
      %1665 = vmatprep.subr.mxu0 0.0
      %1666 = vmatpush1.xpose.msra.mxu0 0.0
      %1667 = vmatprep.subr.mxu0 0.0
      %1668 = vmatpush1.xpose.msra.mxu0 0.0
      %1669 = vmatprep.subr.mxu0 0.0
      %1670 = vmatpush1.xpose.msra.mxu0 0.0
      %1671 = vmatprep.subr.mxu0 0.0
      %1672 = vmatpush1.xpose.msra.mxu0 0.0
      %1673 = vmatprep.subr.mxu0 0.0
      %1674 = vmatpush1.xpose.msra.mxu0 0.0
      %1675 = vmatprep.subr.mxu0 0.0
      %1676 = vmatpush1.xpose.msra.mxu0 0.0
      %1677 = vmatprep.subr.mxu0 0.0
      %1678 = vmatpush1.xpose.msra.mxu0 0.0
      %1679 = vmatprep.subr.mxu0 0.0
      %1680 = vmatpush1.xpose.msra.mxu0 0.0
      %1681 = vmatprep.subr.mxu0 0.0
      %1682 = vmatpush1.xpose.msra.mxu0 0.0
      %1683 = vmatprep.subr.mxu0 0.0
      %1684 = vmatpush1.xpose.msra.mxu0 0.0
      %1685 = vmatprep.subr.mxu0 0.0
      %1686 = vmatpush1.xpose.msra.mxu0 0.0
      %1687 = vmatprep.subr.mxu0 0.0
      %1688 = vmatpush1.xpose.msra.mxu0 0.0
      %1689 = vmatprep.subr.mxu0 0.0
      %1690 = vmatpush1.xpose.msra.mxu0 0.0
      %1691 = vmatprep.mubr.f32.mxu0 %v1611
      %1692 = vmatmul.mubr.f32.gmra.mrb[0].mxu0 %v1579
      %v1693 = vpop.f32.mrb[0].mxu0
      %v1694 = vadd.f32 0.0, %v1693
      %v1695 = vpop.f32.mrb[0].mxu0
      %1696 = vdwg.mxu0
      %1697 = vst [vmem:[%s246] sm:$0xff] %v1694
      %p1698 = scmp.lt.s32.totalorder %s18, 1
      %s1699 = scalar_select %p1698, %s18, 1
      %p1700 = scmp.lt.s32.totalorder %s19, 1
      %s1701 = scalar_select %p1700, %s19, 1
      %s1702 = smul.addr %s1699, 2
      %s1703 = sadd.s32 %s1701, %s1702
      %s1704 = smul.addr %s1703, 8
      %s1705 = scalar_lea.vmem %s3, %s1704
      // Predicated region
      $region33: #{fourier_cross_attention.3} parent=31 // pred_check
        %p1706 = pneg %p126
      $region34: #{fourier_cross_attention.3} parent=31 // pred_check_branch
        %1708 = sbr.rel (%p1706) target = $region36
      $region35: #{fourier_cross_attention.3} parent=31 // pred_region
        _
      $region36: #{fourier_cross_attention.3} parent=31 // pred_fallthru
        _
    $region32: #{fourier_cross_attention.3} parent=5 // pred_fallthru
      _
    %p1709 = scmp.le.s32.totalorder 2, %s9
    // Predicated region
    $region37: #{fourier_cross_attention.3} parent=5 // pred_check
      %p1710 = pneg %p1709
    $region38: #{fourier_cross_attention.3} parent=5 // pred_check_branch
      %1712 = sbr.rel (%p1710) target = $region40
    $region39: #{fourier_cross_attention.3} parent=5 // pred_region
      %s1713 = ssub.s32 %s9, 2
      // Predicated region
      $region41: #{fourier_cross_attention.3} parent=39 // pred_check
        %p1714 = pneg %p132
      $region42: #{fourier_cross_attention.3} parent=39 // pred_check_branch
        %1716 = sbr.rel (%p1714) target = $region44
      $region43: #{fourier_cross_attention.3} parent=39 // pred_region
        %p1717 = scmp.lt.s32.totalorder %s20, 1
        %s1718 = scalar_select %p1717, %s20, 1
        %p1719 = scmp.lt.s32.totalorder %s21, 1
        %s1720 = scalar_select %p1719, %s21, 1
        %s1721 = smul.addr %s1718, 2
        %s1722 = sadd.s32 %s1720, %s1721
        %s1723 = smul.addr %s1722, 8
        %s1724 = scalar_lea.vmem %s3, %s1723
      $region44: #{fourier_cross_attention.3} parent=39 // pred_fallthru
        _
    $region40: #{fourier_cross_attention.3} parent=5 // pred_fallthru
      _
  $region6: #{fourier_cross_attention.3} parent=0 // loop_footer
    %s13 = sadd.s32 1, %s9
  $region7: #{fourier_cross_attention.3} parent=0 // loop_footer_branch
    %8 = sbr.rel target = $region3
  $region8: #{fourier_cross_attention.3} parent=0 // loop_exit
    _

</llo_original>
